<compile_context>
chip_gen: v7x
topology: tpu7x:2x2x1
jax: 0.10.0
libtpu: 0.0.40
codegen_flags: <defaults>
</compile_context>

<pallas_src>
import jax
import jax.numpy as jnp
import numpy as np
from jax import lax
from jax.experimental import pallas as pl
from jax.experimental.pallas import tpu as pltpu


def _seqcompare_lstm_kernel(x_ref, w_in_ref, bias_ref, w_rec_ref,
                            wlin_ref, blin_ref, out_ref):
    """Wavefronted 2-layer LSTM + time-mean + linear + softmax.

    x_ref    : ((T+1)*BEP, D) bf16  time-major (row = t*BEP + b); the last
                                    timestep is a zero pad (wavefront epilogue).
    w_in_ref : (D, 8H)  bf16   input->gates, cols [i0,i1,f0,f1,o0,o1,g0,g1];
                               layer-1 cols are zero, i/f/o cols pre-scaled 0.5.
    bias_ref : (1, 8H)  f32    combined biases of both layers, same layout.
    w_rec_ref: (2H, 8H) bf16   fused [[whh0, wih1], [0, whh1]]; rows 0:H
                               multiply h0, rows H:2H multiply h1.
    wlin_ref : (H, O)   bf16   final linear;  blin_ref : (1, O) f32.
    out_ref  : (BEP, O) f32    softmax probabilities.
    """
    BEP, _ = out_ref.shape
    H8 = w_rec_ref.shape[1]
    H = H8 // 8
    H2 = 2 * H
    T = x_ref.shape[0] // BEP - 1           # trailing timestep is the pad row

    # Lane-constant vectors (compile-time): sigmoid-as-tanh affine + prologue mask.
    col8 = lax.broadcasted_iota(jnp.int32, (1, H8), 1)
    sig_scale = jnp.where(col8 < 6 * H, 0.5, 1.0).astype(jnp.float32)
    sig_shift = jnp.where(col8 < 6 * H, 0.5, 0.0).astype(jnp.float32)
    col2 = lax.broadcasted_iota(jnp.int32, (1, H2), 1)
    layer0_mask = jnp.where(col2 < H, 1.0, 0.0).astype(jnp.float32)

    w_rec = w_rec_ref[...]
    wlin = wlin_ref[...]

    # Hoisted input projection (+ biases) for all timesteps: one MXU call.
    gin = (jnp.dot(x_ref[...], w_in_ref[...],
                   preferred_element_type=jnp.float32) + bias_ref[...])

    def gate_act(gates):
        # One tanh over the whole 8H slab; i/f/o lanes get the 0.5*t+0.5 affine
        # (weights/biases were pre-scaled by 0.5 -> this equals sigmoid(z)).
        a = jnp.tanh(gates) * sig_scale + sig_shift
        # i, f, o, g — each (BEP, 2H), all slices 128-lane-tile aligned.
        return (a[:, 0:H2], a[:, H2:2 * H2],
                a[:, 2 * H2:3 * H2], a[:, 3 * H2:4 * H2])

    # ---- wavefront prologue (s = 0): layer-0 only; all states are zero, so no
    #      recurrent matmul is needed; the layer-1 half is forced to zero.
    i, f, o, g = gate_act(gin[0:BEP, :])
    c = (i * g) * layer0_mask               # packed [c0(0) | 0]
    h = o * jnp.tanh(c)                     # packed [h0(0) | 0]
    acc = jnp.zeros((BEP, H2), jnp.float32)

    # ---- steady wavefront: iteration s computes layer-0(t=s) and layer-1(t=s-1)
    #      with a single fused matmul and a single activation slab.
    for s in range(1, T + 1):               # fully unrolled, static indices
        pre = jnp.dot(h.astype(w_rec.dtype), w_rec,
                      preferred_element_type=jnp.float32)          # (BEP, 8H)
        i, f, o, g = gate_act(pre + gin[s * BEP:(s + 1) * BEP, :])
        c = f * c + i * g                   # packed [c0(s) | c1(s-1)]
        h = o * jnp.tanh(c)                 # packed [h0(s) | h1(s-1)]
        acc = acc + h                       # only the h1 lanes are used below

    mean1 = acc[:, H:H2] * (1.0 / T)        # mean over time of top-layer outputs
    logits = (jnp.dot(mean1.astype(wlin.dtype), wlin,
                      preferred_element_type=jnp.float32) + blin_ref[...])

    # softmax along the last dim
    m = jnp.max(logits, axis=-1, keepdims=True)
    e = jnp.exp(logits - m)
    denom = jnp.sum(e, axis=-1, keepdims=True)
    out_ref[...] = e * pl.reciprocal(denom, approx=True)


def init_params(key, D, H, O):
    """PyTorch-style uniform(-1/sqrt(H), 1/sqrt(H)) init, transposed to (in, out)."""
    ks = jax.random.split(key, 10)
    bound = 1.0 / np.sqrt(H)

    def u(k, shape):
        return jax.random.uniform(k, shape, jnp.float32, -bound, bound)

    w_ih0 = u(ks[0], (4 * H, D)); w_hh0 = u(ks[1], (4 * H, H))
    b_ih0 = u(ks[2], (4 * H,));   b_hh0 = u(ks[3], (4 * H,))
    w_ih1 = u(ks[4], (4 * H, H)); w_hh1 = u(ks[5], (4 * H, H))
    b_ih1 = u(ks[6], (4 * H,));   b_hh1 = u(ks[7], (4 * H,))
    w_lin = u(ks[8], (O, H));     b_lin = u(ks[9], (O,))

    # Gate column order here is PyTorch's native [i, f, g, o].
    return {
        "wih0": w_ih0.T, "whh0": w_hh0.T, "b0": (b_ih0 + b_hh0)[None, :],
        "wih1": w_ih1.T, "whh1": w_hh1.T, "b1": (b_ih1 + b_hh1)[None, :],
        "wlin": w_lin.T, "blin": b_lin[None, :],
    }


def pack_kernel_params(params):
    """Build interleaved, wavefront-fused kernel weights.

    Column layout of every 8H-wide matrix: [i0, i1, f0, f1, o0, o1, g0, g1].
    i/f/o columns and biases are pre-scaled by 0.5 (sigmoid-as-tanh trick).
    MXU operands are stored as bf16; biases stay f32.
    """
    H = params["whh0"].shape[0]
    D = params["wih0"].shape[0]

    def split(w):   # (in, 4H) with PyTorch gate order [i, f, g, o]
        return {"i": w[:, 0:H], "f": w[:, H:2 * H],
                "g": w[:, 2 * H:3 * H], "o": w[:, 3 * H:4 * H]}

    def zero_gates(rows):
        z = jnp.zeros((rows, H), jnp.float32)
        return {"i": z, "f": z, "g": z, "o": z}

    def interleave(l0, l1):
        return jnp.concatenate(
            [0.5 * l0["i"], 0.5 * l1["i"],
             0.5 * l0["f"], 0.5 * l1["f"],
             0.5 * l0["o"], 0.5 * l1["o"],
             l0["g"], l1["g"]], axis=1)

    wih0, whh0 = split(params["wih0"]), split(params["whh0"])
    wih1, whh1 = split(params["wih1"]), split(params["whh1"])
    b0, b1 = split(params["b0"]), split(params["b1"])

    w_in = interleave(wih0, zero_gates(D))                    # (D, 8H)
    w_rec = jnp.concatenate(
        [interleave(whh0, wih1),                              # rows fed by h0
         interleave(zero_gates(H), whh1)], axis=0)            # rows fed by h1
    bias = interleave(b0, b1)                                 # (1, 8H)

    return {
        "w_in": w_in.astype(jnp.bfloat16),
        "w_rec": w_rec.astype(jnp.bfloat16),
        "bias": bias,
        "wlin": params["wlin"].astype(jnp.bfloat16),
        "blin": params["blin"],
    }


@jax.jit
def seq_compare_forward(seqA, seqB, kparams):
    """seqA, seqB: (B, T, D) float32 -> (pA, pB), each (B, O) float32."""
    B, T, D = seqA.shape
    O = kparams["wlin"].shape[1]
    BE = 2 * B
    BEP = max(8, -(-BE // 8) * 8)            # pad merged batch to a sublane tile

    # Merge both sequences into one batch (the recurrence runs once), go
    # time-major, pad the batch to BEP rows and append one zero timestep
    # (wavefront epilogue), then flatten for the hoisted input projection.
    x = jnp.concatenate([seqA, seqB], axis=0)                 # (BE, T, D)
    x = jnp.transpose(x, (1, 0, 2))                           # (T, BE, D)
    x = jnp.pad(x, ((0, 1), (0, BEP - BE), (0, 0)))           # (T+1, BEP, D)
    x = x.reshape((T + 1) * BEP, D).astype(jnp.bfloat16)

    args = (x, kparams["w_in"], kparams["bias"], kparams["w_rec"],
            kparams["wlin"], kparams["blin"])

    vmem = pl.BlockSpec(memory_space=pltpu.MemorySpace.VMEM)
    out = pl.pallas_call(
        _seqcompare_lstm_kernel,
        out_shape=jax.ShapeDtypeStruct((BEP, O), jnp.float32),
        in_specs=[vmem] * len(args),
        out_specs=vmem,
    )(*args)

    return out[:B], out[B:BE]


def reference_forward(seqA, seqB, params):
    """Plain-JAX f32 reference mirroring SeqCompare('lstm').forward."""
    H = params["whh0"].shape[0]

    def encoder(seq):
        B, T, _ = seq.shape

        def cell(x_t, h, c, wih, whh, b):
            gates = x_t @ wih + h @ whh + b
            i = jax.nn.sigmoid(gates[:, :H])
            f = jax.nn.sigmoid(gates[:, H:2 * H])
            g = jnp.tanh(gates[:, 2 * H:3 * H])
            o = jax.nn.sigmoid(gates[:, 3 * H:])
            c = f * c + i * g
            return o * jnp.tanh(c), c

        h0 = c0 = h1 = c1 = jnp.zeros((B, H), jnp.float32)
        acc = jnp.zeros((B, H), jnp.float32)
        for t in range(T):
            h0, c0 = cell(seq[:, t, :], h0, c0,
                          params["wih0"], params["whh0"], params["b0"])
            h1, c1 = cell(h0, h1, c1,
                          params["wih1"], params["whh1"], params["b1"])
            acc = acc + h1
        mean = acc / T
        logits = mean @ params["wlin"] + params["blin"]
        return jax.nn.softmax(logits, axis=-1)

    return encoder(seqA), encoder(seqB)


if __name__ == "__main__":
    B, T, D = 2, 8, 16      # batch, seqLen, inputSize
    H, O = 64, 64           # hiddenSize, outputSize (module defaults)

    key = jax.random.PRNGKey(0)
    k_params, k_a, k_b = jax.random.split(key, 3)
    params = init_params(k_params, D, H, O)
    kparams = pack_kernel_params(params)

    seqA = jax.random.normal(k_a, (B, T, D), jnp.float32)
    seqB = jax.random.normal(k_b, (B, T, D), jnp.float32)

    pA, pB = seq_compare_forward(seqA, seqB, kparams)
    pA, pB = jax.block_until_ready((pA, pB))

    rA, rB = reference_forward(seqA, seqB, params)
    # bf16 MXU operands + approx softmax reciprocal -> slightly relaxed bounds
    # vs a pure-f32 reference (errors compound over the 8-step recurrence).
    np.testing.assert_allclose(np.asarray(pA), np.asarray(rA), rtol=5e-2, atol=1e-3)
    np.testing.assert_allclose(np.asarray(pB), np.asarray(rB), rtol=5e-2, atol=1e-3)
    assert np.allclose(np.asarray(pA).sum(axis=-1), 1.0, atol=5e-3)
    assert np.allclose(np.asarray(pB).sum(axis=-1), 1.0, atol=5e-3)

    print("KERNEL_OK")
</pallas_src>

<mosaic_0001>
module attributes {stable_mosaic.version = 11 : i64} {
  func.func @_seqcompare_lstm_kernel(%arg0: memref<72x16xbf16, #tpu.memory_space<vmem>>, %arg1: memref<16x512xbf16, #tpu.memory_space<vmem>>, %arg2: memref<1x512xf32, #tpu.memory_space<vmem>>, %arg3: memref<128x512xbf16, #tpu.memory_space<vmem>>, %arg4: memref<64x64xbf16, #tpu.memory_space<vmem>>, %arg5: memref<1x64xf32, #tpu.memory_space<vmem>>, %arg6: memref<8x64xf32, #tpu.memory_space<vmem>>) attributes {dimension_semantics = [], scalar_prefetch = 0 : i64, scratch_operands = 0 : i64, tpu.core_type = #tpu.core_type<tc>} {
    %0 = tpu.iota {dimensions = array<i32: 1>} : vector<1x512xi32>
    %c384_i32 = arith.constant 384 : i32
    %1 = vector.broadcast %c384_i32 : i32 to vector<1x512xi32>
    %2 = arith.cmpi slt, %0, %1 : vector<1x512xi32>
    %cst = arith.constant 5.000000e-01 : f32
    %cst_0 = arith.constant 1.000000e+00 : f32
    %3 = vector.broadcast %cst : f32 to vector<1x512xf32>
    %4 = vector.broadcast %cst_0 : f32 to vector<1x512xf32>
    %5 = arith.select %2, %3, %4 : vector<1x512xi1>, vector<1x512xf32>
    %c384_i32_1 = arith.constant 384 : i32
    %6 = vector.broadcast %c384_i32_1 : i32 to vector<1x512xi32>
    %7 = arith.cmpi slt, %0, %6 : vector<1x512xi32>
    %cst_2 = arith.constant 5.000000e-01 : f32
    %cst_3 = arith.constant 0.000000e+00 : f32
    %8 = vector.broadcast %cst_2 : f32 to vector<1x512xf32>
    %9 = vector.broadcast %cst_3 : f32 to vector<1x512xf32>
    %10 = arith.select %7, %8, %9 : vector<1x512xi1>, vector<1x512xf32>
    %11 = tpu.iota {dimensions = array<i32: 1>} : vector<1x128xi32>
    %c64_i32 = arith.constant 64 : i32
    %12 = vector.broadcast %c64_i32 : i32 to vector<1x128xi32>
    %13 = arith.cmpi slt, %11, %12 : vector<1x128xi32>
    %cst_4 = arith.constant 1.000000e+00 : f32
    %cst_5 = arith.constant 0.000000e+00 : f32
    %14 = vector.broadcast %cst_4 : f32 to vector<1x128xf32>
    %15 = vector.broadcast %cst_5 : f32 to vector<1x128xf32>
    %16 = arith.select %13, %14, %15 : vector<1x128xi1>, vector<1x128xf32>
    %c0 = arith.constant 0 : index
    %c0_6 = arith.constant 0 : index
    %17 = vector.load %arg3[%c0, %c0_6] : memref<128x512xbf16, #tpu.memory_space<vmem>>, vector<128x512xbf16>
    %c0_7 = arith.constant 0 : index
    %c0_8 = arith.constant 0 : index
    %18 = vector.load %arg4[%c0_7, %c0_8] : memref<64x64xbf16, #tpu.memory_space<vmem>>, vector<64x64xbf16>
    %c0_9 = arith.constant 0 : index
    %c0_10 = arith.constant 0 : index
    %19 = vector.load %arg0[%c0_9, %c0_10] : memref<72x16xbf16, #tpu.memory_space<vmem>>, vector<72x16xbf16>
    %c0_11 = arith.constant 0 : index
    %c0_12 = arith.constant 0 : index
    %20 = vector.load %arg1[%c0_11, %c0_12] : memref<16x512xbf16, #tpu.memory_space<vmem>>, vector<16x512xbf16>
    %cst_13 = arith.constant dense<0.000000e+00> : vector<72x512xf32>
    %21 = tpu.matmul %19, %20, %cst_13 {dimension_numbers = #tpu.dot_dimension_numbers<[1], [0], [0], [1], [0, 0, 1, 1], [], []>} : vector<72x16xbf16>, vector<16x512xbf16>, vector<72x512xf32> -> vector<72x512xf32>
    %c0_14 = arith.constant 0 : index
    %c0_15 = arith.constant 0 : index
    %22 = vector.load %arg2[%c0_14, %c0_15] : memref<1x512xf32, #tpu.memory_space<vmem>>, vector<1x512xf32>
    %23 = vector.broadcast %22 : vector<1x512xf32> to vector<72x512xf32>
    %24 = arith.addf %21, %23 : vector<72x512xf32>
    %25 = vector.extract_strided_slice %24 {offsets = [0, 0], sizes = [8, 512], strides = [1, 1]} : vector<72x512xf32> to vector<8x512xf32>
    %26 = math.tanh %25 : vector<8x512xf32>
    %27 = vector.broadcast %5 : vector<1x512xf32> to vector<8x512xf32>
    %28 = arith.mulf %26, %27 : vector<8x512xf32>
    %29 = vector.broadcast %10 : vector<1x512xf32> to vector<8x512xf32>
    %30 = arith.addf %28, %29 : vector<8x512xf32>
    %31 = vector.extract_strided_slice %30 {offsets = [0, 0], sizes = [8, 128], strides = [1, 1]} : vector<8x512xf32> to vector<8x128xf32>
    %32 = vector.extract_strided_slice %30 {offsets = [0, 256], sizes = [8, 128], strides = [1, 1]} : vector<8x512xf32> to vector<8x128xf32>
    %33 = vector.extract_strided_slice %30 {offsets = [0, 384], sizes = [8, 128], strides = [1, 1]} : vector<8x512xf32> to vector<8x128xf32>
    %34 = arith.mulf %31, %33 : vector<8x128xf32>
    %35 = vector.broadcast %16 : vector<1x128xf32> to vector<8x128xf32>
    %36 = arith.mulf %34, %35 : vector<8x128xf32>
    %37 = math.tanh %36 : vector<8x128xf32>
    %38 = arith.mulf %32, %37 : vector<8x128xf32>
    %cst_16 = arith.constant 0.000000e+00 : f32
    %39 = vector.broadcast %cst_16 : f32 to vector<8x128xf32>
    %40 = arith.truncf %38 : vector<8x128xf32> to vector<8x128xbf16>
    %cst_17 = arith.constant dense<0.000000e+00> : vector<8x512xf32>
    %41 = tpu.matmul %40, %17, %cst_17 {dimension_numbers = #tpu.dot_dimension_numbers<[1], [0], [0], [1], [0, 0, 1, 1], [], []>} : vector<8x128xbf16>, vector<128x512xbf16>, vector<8x512xf32> -> vector<8x512xf32>
    %42 = vector.extract_strided_slice %24 {offsets = [8, 0], sizes = [8, 512], strides = [1, 1]} : vector<72x512xf32> to vector<8x512xf32>
    %43 = arith.addf %41, %42 : vector<8x512xf32>
    %44 = math.tanh %43 : vector<8x512xf32>
    %45 = vector.broadcast %5 : vector<1x512xf32> to vector<8x512xf32>
    %46 = arith.mulf %44, %45 : vector<8x512xf32>
    %47 = vector.broadcast %10 : vector<1x512xf32> to vector<8x512xf32>
    %48 = arith.addf %46, %47 : vector<8x512xf32>
    %49 = vector.extract_strided_slice %48 {offsets = [0, 0], sizes = [8, 128], strides = [1, 1]} : vector<8x512xf32> to vector<8x128xf32>
    %50 = vector.extract_strided_slice %48 {offsets = [0, 128], sizes = [8, 128], strides = [1, 1]} : vector<8x512xf32> to vector<8x128xf32>
    %51 = vector.extract_strided_slice %48 {offsets = [0, 256], sizes = [8, 128], strides = [1, 1]} : vector<8x512xf32> to vector<8x128xf32>
    %52 = vector.extract_strided_slice %48 {offsets = [0, 384], sizes = [8, 128], strides = [1, 1]} : vector<8x512xf32> to vector<8x128xf32>
    %53 = arith.mulf %50, %36 : vector<8x128xf32>
    %54 = arith.mulf %49, %52 : vector<8x128xf32>
    %55 = arith.addf %53, %54 : vector<8x128xf32>
    %56 = math.tanh %55 : vector<8x128xf32>
    %57 = arith.mulf %51, %56 : vector<8x128xf32>
    %58 = arith.addf %39, %57 : vector<8x128xf32>
    %59 = arith.truncf %57 : vector<8x128xf32> to vector<8x128xbf16>
    %cst_18 = arith.constant dense<0.000000e+00> : vector<8x512xf32>
    %60 = tpu.matmul %59, %17, %cst_18 {dimension_numbers = #tpu.dot_dimension_numbers<[1], [0], [0], [1], [0, 0, 1, 1], [], []>} : vector<8x128xbf16>, vector<128x512xbf16>, vector<8x512xf32> -> vector<8x512xf32>
    %61 = vector.extract_strided_slice %24 {offsets = [16, 0], sizes = [8, 512], strides = [1, 1]} : vector<72x512xf32> to vector<8x512xf32>
    %62 = arith.addf %60, %61 : vector<8x512xf32>
    %63 = math.tanh %62 : vector<8x512xf32>
    %64 = vector.broadcast %5 : vector<1x512xf32> to vector<8x512xf32>
    %65 = arith.mulf %63, %64 : vector<8x512xf32>
    %66 = vector.broadcast %10 : vector<1x512xf32> to vector<8x512xf32>
    %67 = arith.addf %65, %66 : vector<8x512xf32>
    %68 = vector.extract_strided_slice %67 {offsets = [0, 0], sizes = [8, 128], strides = [1, 1]} : vector<8x512xf32> to vector<8x128xf32>
    %69 = vector.extract_strided_slice %67 {offsets = [0, 128], sizes = [8, 128], strides = [1, 1]} : vector<8x512xf32> to vector<8x128xf32>
    %70 = vector.extract_strided_slice %67 {offsets = [0, 256], sizes = [8, 128], strides = [1, 1]} : vector<8x512xf32> to vector<8x128xf32>
    %71 = vector.extract_strided_slice %67 {offsets = [0, 384], sizes = [8, 128], strides = [1, 1]} : vector<8x512xf32> to vector<8x128xf32>
    %72 = arith.mulf %69, %55 : vector<8x128xf32>
    %73 = arith.mulf %68, %71 : vector<8x128xf32>
    %74 = arith.addf %72, %73 : vector<8x128xf32>
    %75 = math.tanh %74 : vector<8x128xf32>
    %76 = arith.mulf %70, %75 : vector<8x128xf32>
    %77 = arith.addf %58, %76 : vector<8x128xf32>
    %78 = arith.truncf %76 : vector<8x128xf32> to vector<8x128xbf16>
    %cst_19 = arith.constant dense<0.000000e+00> : vector<8x512xf32>
    %79 = tpu.matmul %78, %17, %cst_19 {dimension_numbers = #tpu.dot_dimension_numbers<[1], [0], [0], [1], [0, 0, 1, 1], [], []>} : vector<8x128xbf16>, vector<128x512xbf16>, vector<8x512xf32> -> vector<8x512xf32>
    %80 = vector.extract_strided_slice %24 {offsets = [24, 0], sizes = [8, 512], strides = [1, 1]} : vector<72x512xf32> to vector<8x512xf32>
    %81 = arith.addf %79, %80 : vector<8x512xf32>
    %82 = math.tanh %81 : vector<8x512xf32>
    %83 = vector.broadcast %5 : vector<1x512xf32> to vector<8x512xf32>
    %84 = arith.mulf %82, %83 : vector<8x512xf32>
    %85 = vector.broadcast %10 : vector<1x512xf32> to vector<8x512xf32>
    %86 = arith.addf %84, %85 : vector<8x512xf32>
    %87 = vector.extract_strided_slice %86 {offsets = [0, 0], sizes = [8, 128], strides = [1, 1]} : vector<8x512xf32> to vector<8x128xf32>
    %88 = vector.extract_strided_slice %86 {offsets = [0, 128], sizes = [8, 128], strides = [1, 1]} : vector<8x512xf32> to vector<8x128xf32>
    %89 = vector.extract_strided_slice %86 {offsets = [0, 256], sizes = [8, 128], strides = [1, 1]} : vector<8x512xf32> to vector<8x128xf32>
    %90 = vector.extract_strided_slice %86 {offsets = [0, 384], sizes = [8, 128], strides = [1, 1]} : vector<8x512xf32> to vector<8x128xf32>
    %91 = arith.mulf %88, %74 : vector<8x128xf32>
    %92 = arith.mulf %87, %90 : vector<8x128xf32>
    %93 = arith.addf %91, %92 : vector<8x128xf32>
    %94 = math.tanh %93 : vector<8x128xf32>
    %95 = arith.mulf %89, %94 : vector<8x128xf32>
    %96 = arith.addf %77, %95 : vector<8x128xf32>
    %97 = arith.truncf %95 : vector<8x128xf32> to vector<8x128xbf16>
    %cst_20 = arith.constant dense<0.000000e+00> : vector<8x512xf32>
    %98 = tpu.matmul %97, %17, %cst_20 {dimension_numbers = #tpu.dot_dimension_numbers<[1], [0], [0], [1], [0, 0, 1, 1], [], []>} : vector<8x128xbf16>, vector<128x512xbf16>, vector<8x512xf32> -> vector<8x512xf32>
    %99 = vector.extract_strided_slice %24 {offsets = [32, 0], sizes = [8, 512], strides = [1, 1]} : vector<72x512xf32> to vector<8x512xf32>
    %100 = arith.addf %98, %99 : vector<8x512xf32>
    %101 = math.tanh %100 : vector<8x512xf32>
    %102 = vector.broadcast %5 : vector<1x512xf32> to vector<8x512xf32>
    %103 = arith.mulf %101, %102 : vector<8x512xf32>
    %104 = vector.broadcast %10 : vector<1x512xf32> to vector<8x512xf32>
    %105 = arith.addf %103, %104 : vector<8x512xf32>
    %106 = vector.extract_strided_slice %105 {offsets = [0, 0], sizes = [8, 128], strides = [1, 1]} : vector<8x512xf32> to vector<8x128xf32>
    %107 = vector.extract_strided_slice %105 {offsets = [0, 128], sizes = [8, 128], strides = [1, 1]} : vector<8x512xf32> to vector<8x128xf32>
    %108 = vector.extract_strided_slice %105 {offsets = [0, 256], sizes = [8, 128], strides = [1, 1]} : vector<8x512xf32> to vector<8x128xf32>
    %109 = vector.extract_strided_slice %105 {offsets = [0, 384], sizes = [8, 128], strides = [1, 1]} : vector<8x512xf32> to vector<8x128xf32>
    %110 = arith.mulf %107, %93 : vector<8x128xf32>
    %111 = arith.mulf %106, %109 : vector<8x128xf32>
    %112 = arith.addf %110, %111 : vector<8x128xf32>
    %113 = math.tanh %112 : vector<8x128xf32>
    %114 = arith.mulf %108, %113 : vector<8x128xf32>
    %115 = arith.addf %96, %114 : vector<8x128xf32>
    %116 = arith.truncf %114 : vector<8x128xf32> to vector<8x128xbf16>
    %cst_21 = arith.constant dense<0.000000e+00> : vector<8x512xf32>
    %117 = tpu.matmul %116, %17, %cst_21 {dimension_numbers = #tpu.dot_dimension_numbers<[1], [0], [0], [1], [0, 0, 1, 1], [], []>} : vector<8x128xbf16>, vector<128x512xbf16>, vector<8x512xf32> -> vector<8x512xf32>
    %118 = vector.extract_strided_slice %24 {offsets = [40, 0], sizes = [8, 512], strides = [1, 1]} : vector<72x512xf32> to vector<8x512xf32>
    %119 = arith.addf %117, %118 : vector<8x512xf32>
    %120 = math.tanh %119 : vector<8x512xf32>
    %121 = vector.broadcast %5 : vector<1x512xf32> to vector<8x512xf32>
    %122 = arith.mulf %120, %121 : vector<8x512xf32>
    %123 = vector.broadcast %10 : vector<1x512xf32> to vector<8x512xf32>
    %124 = arith.addf %122, %123 : vector<8x512xf32>
    %125 = vector.extract_strided_slice %124 {offsets = [0, 0], sizes = [8, 128], strides = [1, 1]} : vector<8x512xf32> to vector<8x128xf32>
    %126 = vector.extract_strided_slice %124 {offsets = [0, 128], sizes = [8, 128], strides = [1, 1]} : vector<8x512xf32> to vector<8x128xf32>
    %127 = vector.extract_strided_slice %124 {offsets = [0, 256], sizes = [8, 128], strides = [1, 1]} : vector<8x512xf32> to vector<8x128xf32>
    %128 = vector.extract_strided_slice %124 {offsets = [0, 384], sizes = [8, 128], strides = [1, 1]} : vector<8x512xf32> to vector<8x128xf32>
    %129 = arith.mulf %126, %112 : vector<8x128xf32>
    %130 = arith.mulf %125, %128 : vector<8x128xf32>
    %131 = arith.addf %129, %130 : vector<8x128xf32>
    %132 = math.tanh %131 : vector<8x128xf32>
    %133 = arith.mulf %127, %132 : vector<8x128xf32>
    %134 = arith.addf %115, %133 : vector<8x128xf32>
    %135 = arith.truncf %133 : vector<8x128xf32> to vector<8x128xbf16>
    %cst_22 = arith.constant dense<0.000000e+00> : vector<8x512xf32>
    %136 = tpu.matmul %135, %17, %cst_22 {dimension_numbers = #tpu.dot_dimension_numbers<[1], [0], [0], [1], [0, 0, 1, 1], [], []>} : vector<8x128xbf16>, vector<128x512xbf16>, vector<8x512xf32> -> vector<8x512xf32>
    %137 = vector.extract_strided_slice %24 {offsets = [48, 0], sizes = [8, 512], strides = [1, 1]} : vector<72x512xf32> to vector<8x512xf32>
    %138 = arith.addf %136, %137 : vector<8x512xf32>
    %139 = math.tanh %138 : vector<8x512xf32>
    %140 = vector.broadcast %5 : vector<1x512xf32> to vector<8x512xf32>
    %141 = arith.mulf %139, %140 : vector<8x512xf32>
    %142 = vector.broadcast %10 : vector<1x512xf32> to vector<8x512xf32>
    %143 = arith.addf %141, %142 : vector<8x512xf32>
    %144 = vector.extract_strided_slice %143 {offsets = [0, 0], sizes = [8, 128], strides = [1, 1]} : vector<8x512xf32> to vector<8x128xf32>
    %145 = vector.extract_strided_slice %143 {offsets = [0, 128], sizes = [8, 128], strides = [1, 1]} : vector<8x512xf32> to vector<8x128xf32>
    %146 = vector.extract_strided_slice %143 {offsets = [0, 256], sizes = [8, 128], strides = [1, 1]} : vector<8x512xf32> to vector<8x128xf32>
    %147 = vector.extract_strided_slice %143 {offsets = [0, 384], sizes = [8, 128], strides = [1, 1]} : vector<8x512xf32> to vector<8x128xf32>
    %148 = arith.mulf %145, %131 : vector<8x128xf32>
    %149 = arith.mulf %144, %147 : vector<8x128xf32>
    %150 = arith.addf %148, %149 : vector<8x128xf32>
    %151 = math.tanh %150 : vector<8x128xf32>
    %152 = arith.mulf %146, %151 : vector<8x128xf32>
    %153 = arith.addf %134, %152 : vector<8x128xf32>
    %154 = arith.truncf %152 : vector<8x128xf32> to vector<8x128xbf16>
    %cst_23 = arith.constant dense<0.000000e+00> : vector<8x512xf32>
    %155 = tpu.matmul %154, %17, %cst_23 {dimension_numbers = #tpu.dot_dimension_numbers<[1], [0], [0], [1], [0, 0, 1, 1], [], []>} : vector<8x128xbf16>, vector<128x512xbf16>, vector<8x512xf32> -> vector<8x512xf32>
    %156 = vector.extract_strided_slice %24 {offsets = [56, 0], sizes = [8, 512], strides = [1, 1]} : vector<72x512xf32> to vector<8x512xf32>
    %157 = arith.addf %155, %156 : vector<8x512xf32>
    %158 = math.tanh %157 : vector<8x512xf32>
    %159 = vector.broadcast %5 : vector<1x512xf32> to vector<8x512xf32>
    %160 = arith.mulf %158, %159 : vector<8x512xf32>
    %161 = vector.broadcast %10 : vector<1x512xf32> to vector<8x512xf32>
    %162 = arith.addf %160, %161 : vector<8x512xf32>
    %163 = vector.extract_strided_slice %162 {offsets = [0, 0], sizes = [8, 128], strides = [1, 1]} : vector<8x512xf32> to vector<8x128xf32>
    %164 = vector.extract_strided_slice %162 {offsets = [0, 128], sizes = [8, 128], strides = [1, 1]} : vector<8x512xf32> to vector<8x128xf32>
    %165 = vector.extract_strided_slice %162 {offsets = [0, 256], sizes = [8, 128], strides = [1, 1]} : vector<8x512xf32> to vector<8x128xf32>
    %166 = vector.extract_strided_slice %162 {offsets = [0, 384], sizes = [8, 128], strides = [1, 1]} : vector<8x512xf32> to vector<8x128xf32>
    %167 = arith.mulf %164, %150 : vector<8x128xf32>
    %168 = arith.mulf %163, %166 : vector<8x128xf32>
    %169 = arith.addf %167, %168 : vector<8x128xf32>
    %170 = math.tanh %169 : vector<8x128xf32>
    %171 = arith.mulf %165, %170 : vector<8x128xf32>
    %172 = arith.addf %153, %171 : vector<8x128xf32>
    %173 = arith.truncf %171 : vector<8x128xf32> to vector<8x128xbf16>
    %cst_24 = arith.constant dense<0.000000e+00> : vector<8x512xf32>
    %174 = tpu.matmul %173, %17, %cst_24 {dimension_numbers = #tpu.dot_dimension_numbers<[1], [0], [0], [1], [0, 0, 1, 1], [], []>} : vector<8x128xbf16>, vector<128x512xbf16>, vector<8x512xf32> -> vector<8x512xf32>
    %175 = vector.extract_strided_slice %24 {offsets = [64, 0], sizes = [8, 512], strides = [1, 1]} : vector<72x512xf32> to vector<8x512xf32>
    %176 = arith.addf %174, %175 : vector<8x512xf32>
    %177 = math.tanh %176 : vector<8x512xf32>
    %178 = vector.broadcast %5 : vector<1x512xf32> to vector<8x512xf32>
    %179 = arith.mulf %177, %178 : vector<8x512xf32>
    %180 = vector.broadcast %10 : vector<1x512xf32> to vector<8x512xf32>
    %181 = arith.addf %179, %180 : vector<8x512xf32>
    %182 = vector.extract_strided_slice %181 {offsets = [0, 0], sizes = [8, 128], strides = [1, 1]} : vector<8x512xf32> to vector<8x128xf32>
    %183 = vector.extract_strided_slice %181 {offsets = [0, 128], sizes = [8, 128], strides = [1, 1]} : vector<8x512xf32> to vector<8x128xf32>
    %184 = vector.extract_strided_slice %181 {offsets = [0, 256], sizes = [8, 128], strides = [1, 1]} : vector<8x512xf32> to vector<8x128xf32>
    %185 = vector.extract_strided_slice %181 {offsets = [0, 384], sizes = [8, 128], strides = [1, 1]} : vector<8x512xf32> to vector<8x128xf32>
    %186 = arith.mulf %183, %169 : vector<8x128xf32>
    %187 = arith.mulf %182, %185 : vector<8x128xf32>
    %188 = arith.addf %186, %187 : vector<8x128xf32>
    %189 = math.tanh %188 : vector<8x128xf32>
    %190 = arith.mulf %184, %189 : vector<8x128xf32>
    %191 = arith.addf %172, %190 : vector<8x128xf32>
    %192 = vector.extract_strided_slice %191 {offsets = [0, 64], sizes = [8, 64], strides = [1, 1]} : vector<8x128xf32> to vector<8x64xf32>
    %cst_25 = arith.constant 1.250000e-01 : f32
    %193 = vector.broadcast %cst_25 : f32 to vector<8x64xf32>
    %194 = arith.mulf %192, %193 : vector<8x64xf32>
    %195 = arith.truncf %194 : vector<8x64xf32> to vector<8x64xbf16>
    %cst_26 = arith.constant dense<0.000000e+00> : vector<8x64xf32>
    %196 = tpu.matmul %195, %18, %cst_26 {dimension_numbers = #tpu.dot_dimension_numbers<[1], [0], [0], [1], [0, 0, 1, 1], [], []>} : vector<8x64xbf16>, vector<64x64xbf16>, vector<8x64xf32> -> vector<8x64xf32>
    %c0_27 = arith.constant 0 : index
    %c0_28 = arith.constant 0 : index
    %197 = vector.load %arg5[%c0_27, %c0_28] : memref<1x64xf32, #tpu.memory_space<vmem>>, vector<1x64xf32>
    %198 = vector.broadcast %197 : vector<1x64xf32> to vector<8x64xf32>
    %199 = arith.addf %196, %198 : vector<8x64xf32>
    %cst_29 = arith.constant dense<0xFF800000> : vector<8xf32>
    %200 = vector.multi_reduction <maximumf>, %199, %cst_29 [1] : vector<8x64xf32> to vector<8xf32>
    %201 = vector.shape_cast %200 : vector<8xf32> to vector<8x1xf32>
    %202 = vector.broadcast %201 : vector<8x1xf32> to vector<8x64xf32>
    %203 = arith.subf %199, %202 : vector<8x64xf32>
    %204 = math.exp %203 : vector<8x64xf32>
    %cst_30 = arith.constant dense<0.000000e+00> : vector<8xf32>
    %205 = vector.multi_reduction <add>, %204, %cst_30 [1] : vector<8x64xf32> to vector<8xf32>
    %206 = vector.shape_cast %205 : vector<8xf32> to vector<8x1xf32>
    %207 = tpu.reciprocal %206 {approx = true} : vector<8x1xf32> -> vector<8x1xf32>
    %208 = vector.broadcast %207 : vector<8x1xf32> to vector<8x64xf32>
    %209 = arith.mulf %204, %208 : vector<8x64xf32>
    %c0_31 = arith.constant 0 : index
    %c0_32 = arith.constant 0 : index
    %210 = vector.load %arg6[%c0_31, %c0_32] : memref<8x64xf32, #tpu.memory_space<vmem>>, vector<8x64xf32>
    tpu.vector_store %arg6[%c0_31, %c0_32], %209 {strides = array<i32>} : memref<8x64xf32, #tpu.memory_space<vmem>>, vector<8x64xf32>,
    return
  }
}

</mosaic_0001>

<llo_original>
// kernel: seq_compare_forward.1
$region0: #{seq_compare_forward.1}
  #allocation0 [shape = 'u32[]', space=smem, size = 0x4, offset = 0x4, fixed_abs, tag = 'smem constant byte address 0x4 - core index']
  #allocation1 [shape = 'u32[144,128]{1,0:T(1,128)}', space=vmem, size = 0x12000, scoped, tag = 'internal scratch']
  %s0 = inlined_call_operand.vmem [shape: bf16[72,16], index: 0, kind: input, shape index: {}]
  %s1 = inlined_call_operand.vmem [shape: bf16[16,512], index: 1, kind: input, shape index: {}]
  %s2 = inlined_call_operand.vmem [shape: f32[1,512], index: 2, kind: input, shape index: {}]
  %s3 = inlined_call_operand.hbm [shape: bf16[128,512], index: 3, kind: input, shape index: {}]
  %s4 = inlined_call_operand.vmem [shape: bf16[64,64], index: 4, kind: input, shape index: {}]
  %s5 = inlined_call_operand.vmem [shape: f32[1,64], index: 5, kind: input, shape index: {}]
  %s6 = inlined_call_operand.vmem [shape: f32[8,64], index: 6, kind: output, shape index: {}]
  %s7 = sld [smem:[#allocation0]]
  $region38: #{seq_compare_forward.1} parent=0
    _
  %s9 = ssub.s32 1, %s7
  %s10 = scalar_select 0, %s9, %s7
  $region1: #{seq_compare_forward.1} parent=0
    #allocation2 [shape = 'u8[131072]{0}', space=vmem, size = 0x20000, scoped, tag = 'input window, operand 3, single buffered']
    #allocation3 [shape = 's32[1]{0}', space=sflag, size = 0x4, scoped, tag = 'scoped memory for seq_compare_forward.1']
    %11 = vsyncpa [#allocation3], 0
    // Predicated region
    $region2: #{seq_compare_forward.1} parent=1 // pred_check
      _
    $region3: #{seq_compare_forward.1} parent=1 // pred_check_branch
      %13 = sbr.rel (0) target = $region5
    $region4: #{seq_compare_forward.1} parent=1 // pred_region
      _
    $region5: #{seq_compare_forward.1} parent=1 // pred_fallthru
      _
    // Predicated region
    $region6: #{seq_compare_forward.1} parent=1 // pred_check
      _
    $region7: #{seq_compare_forward.1} parent=1 // pred_check_branch
      %15 = sbr.rel (0) target = $region9
    $region8: #{seq_compare_forward.1} parent=1 // pred_region
      _
    $region9: #{seq_compare_forward.1} parent=1 // pred_fallthru
      _
    // Predicated region
    $region10: #{seq_compare_forward.1} parent=1 // pred_check
      _
    $region11: #{seq_compare_forward.1} parent=1 // pred_check_branch
      %17 = sbr.rel (0) target = $region13
    $region12: #{seq_compare_forward.1} parent=1 // pred_region
      _
    $region13: #{seq_compare_forward.1} parent=1 // pred_fallthru
      _
    // Predicated region
    $region14: #{seq_compare_forward.1} parent=1 // pred_check
      _
    $region15: #{seq_compare_forward.1} parent=1 // pred_check_branch
      %19 = sbr.rel (0) target = $region17
    $region16: #{seq_compare_forward.1} parent=1 // pred_region
      %s21 = ssub.s32 4096, 4096
      %22 = vsyncadd [#allocation3], %s21
      %s23 = sshll.u32 [#allocation2], 4
      %s24 = int_to_ptr.vmem [resolvable:$true] %s23
      %29 = dma.hbm_to_vmem [thread:$0]  %s3, 4096, %s24, [#allocation3], 256, 256, 16
    $region17: #{seq_compare_forward.1} parent=1 // pred_fallthru
      _
    // Predicated region
    $region18: #{seq_compare_forward.1} parent=1 // pred_check
      _
    $region19: #{seq_compare_forward.1} parent=1 // pred_check_branch
      %31 = sbr.rel (0) target = $region21
    $region20: #{seq_compare_forward.1} parent=1 // pred_region
      _
    $region21: #{seq_compare_forward.1} parent=1 // pred_fallthru
      _
    // Predicated region
    $region22: #{seq_compare_forward.1} parent=1 // pred_check
      _
    $region23: #{seq_compare_forward.1} parent=1 // pred_check_branch
      %33 = sbr.rel (0) target = $region25
    $region24: #{seq_compare_forward.1} parent=1 // pred_region
      _
    $region25: #{seq_compare_forward.1} parent=1 // pred_fallthru
      _
    // Predicated region
    $region26: #{seq_compare_forward.1} parent=1 // pred_check
      _
    $region27: #{seq_compare_forward.1} parent=1 // pred_check_branch
      %35 = sbr.rel (0) target = $region29
    $region28: #{seq_compare_forward.1} parent=1 // pred_region
      %36 = dma.done [#allocation3], 4096
    $region29: #{seq_compare_forward.1} parent=1 // pred_fallthru
      _
    %v38 = vlaneseq
    %v39 = vand.u32 %v38, 127
    %v40 = vadd.s32 %v39, 128
    %v41 = vadd.s32 %v39, 256
    %v42 = vadd.s32 %v39, 384
    %vm43 = vcmp.lt.s32.totalorder %v39, 384
    %vm44 = vcmp.lt.s32.totalorder %v40, 384
    %vm45 = vcmp.lt.s32.totalorder %v41, 384
    %vm46 = vcmp.lt.s32.totalorder %v42, 384
    %v47 = vsel %vm43, 0.5, 1.0
    %v48 = vsel %vm44, 0.5, 1.0
    %v49 = vsel %vm45, 0.5, 1.0
    %v50 = vsel %vm46, 0.5, 1.0
    %v51 = vsel %vm43, 0.5, 0.0
    %v52 = vsel %vm44, 0.5, 0.0
    %v53 = vsel %vm45, 0.5, 0.0
    %v54 = vsel %vm46, 0.5, 0.0
    %vm55 = vcmp.lt.s32.totalorder %v39, 64
    %v56 = vsel %vm55, 1.0, 0.0
    %v57 = vld [vmem:[#allocation2] sm:$0xff]
    %v58 = vld [vmem:[#allocation2 + $0x8] sm:$0xff]
    %v59 = vld [vmem:[#allocation2 + $0x10] sm:$0xff]
    %v60 = vld [vmem:[#allocation2 + $0x18] sm:$0xff]
    %v61 = vld [vmem:[#allocation2 + $0x20] sm:$0xff]
    %v62 = vld [vmem:[#allocation2 + $0x28] sm:$0xff]
    %v63 = vld [vmem:[#allocation2 + $0x30] sm:$0xff]
    %v64 = vld [vmem:[#allocation2 + $0x38] sm:$0xff]
    %v65 = vld [vmem:[#allocation2 + $0x40] sm:$0xff]
    %v66 = vld [vmem:[#allocation2 + $0x48] sm:$0xff]
    %v67 = vld [vmem:[#allocation2 + $0x50] sm:$0xff]
    %v68 = vld [vmem:[#allocation2 + $0x58] sm:$0xff]
    %v69 = vld [vmem:[#allocation2 + $0x60] sm:$0xff]
    %v70 = vld [vmem:[#allocation2 + $0x68] sm:$0xff]
    %v71 = vld [vmem:[#allocation2 + $0x70] sm:$0xff]
    %v72 = vld [vmem:[#allocation2 + $0x78] sm:$0xff]
    %v73 = vld [vmem:[#allocation2 + $0x80] sm:$0xff]
    %v74 = vld [vmem:[#allocation2 + $0x88] sm:$0xff]
    %v75 = vld [vmem:[#allocation2 + $0x90] sm:$0xff]
    %v76 = vld [vmem:[#allocation2 + $0x98] sm:$0xff]
    %v77 = vld [vmem:[#allocation2 + $0xa0] sm:$0xff]
    %v78 = vld [vmem:[#allocation2 + $0xa8] sm:$0xff]
    %v79 = vld [vmem:[#allocation2 + $0xb0] sm:$0xff]
    %v80 = vld [vmem:[#allocation2 + $0xb8] sm:$0xff]
    %v81 = vld [vmem:[#allocation2 + $0xc0] sm:$0xff]
    %v82 = vld [vmem:[#allocation2 + $0xc8] sm:$0xff]
    %v83 = vld [vmem:[#allocation2 + $0xd0] sm:$0xff]
    %v84 = vld [vmem:[#allocation2 + $0xd8] sm:$0xff]
    %v85 = vld [vmem:[#allocation2 + $0xe0] sm:$0xff]
    %v86 = vld [vmem:[#allocation2 + $0xe8] sm:$0xff]
    %v87 = vld [vmem:[#allocation2 + $0xf0] sm:$0xff]
    %v88 = vld [vmem:[#allocation2 + $0xf8] sm:$0xff]
    %v89 = vld [vmem:[%s4] sm:$0xf]
    %v90 = vld [vmem:[%s4 + $0x4] sm:$0xf]
    %v91 = vld [vmem:[%s4 + $0x8] sm:$0xf]
    %v92 = vld [vmem:[%s4 + $0xc] sm:$0xf]
    %v93 = vld [vmem:[%s4 + $0x10] sm:$0xf]
    %v94 = vld [vmem:[%s4 + $0x14] sm:$0xf]
    %v95 = vld [vmem:[%s4 + $0x18] sm:$0xf]
    %v96 = vld [vmem:[%s4 + $0x1c] sm:$0xf]
    %v97 = vld [vmem:[%s0] sm:$0xf]
    %v98 = vld [vmem:[%s0 + $0x4] sm:$0xf]
    %v99 = vld [vmem:[%s0 + $0x8] sm:$0xf]
    %v100 = vld [vmem:[%s0 + $0xc] sm:$0xf]
    %v101 = vld [vmem:[%s0 + $0x10] sm:$0xf]
    %v102 = vld [vmem:[%s0 + $0x14] sm:$0xf]
    %v103 = vld [vmem:[%s0 + $0x18] sm:$0xf]
    %v104 = vld [vmem:[%s0 + $0x1c] sm:$0xf]
    %v105 = vld [vmem:[%s0 + $0x20] sm:$0xf]
    %v106 = vld [vmem:[%s1] sm:$0xff]
    %v107 = vld [vmem:[%s1 + $0x8] sm:$0xff]
    %v108 = vld [vmem:[%s1 + $0x10] sm:$0xff]
    %v109 = vld [vmem:[%s1 + $0x18] sm:$0xff]
    %v110 = vld [vmem:[%s2] sm:$0xf]
    %v112 = vlaneseq
    %v113 = vshrl.u32 %v112, 7
    %v114 = vsub.s32 0, %v113
    %v115 = vrot.slane %v110, %v114
    %v116 = vlaneseq
    %v117 = vshrl.u32 %v116, 7
    %v118 = vsub.s32 1, %v117
    %v119 = vrot.slane %v110, %v118
    %v120 = vlaneseq
    %v121 = vshrl.u32 %v120, 7
    %v122 = vsub.s32 2, %v121
    %v123 = vrot.slane %v110, %v122
    %v124 = vlaneseq
    %v125 = vshrl.u32 %v124, 7
    %v126 = vsub.s32 3, %v125
    %v127 = vrot.slane %v110, %v126
    %v141 = vunpack.c.l.b16 %v97
    %v142 = vunpack.c.l.b16 %v98
    %v143 = vunpack.c.l.b16 %v99
    %v144 = vunpack.c.l.b16 %v100
    %v145 = vunpack.c.l.b16 %v101
    %v146 = vunpack.c.l.b16 %v102
    %v147 = vunpack.c.l.b16 %v103
    %v148 = vunpack.c.l.b16 %v104
    %v149 = vunpack.c.l.b16 %v105
    %v150 = vpack.c.b16 %v142, %v141
    %v151 = vpack.c.b16 %v144, %v143
    %v152 = vpack.c.b16 %v146, %v145
    %v153 = vpack.c.b16 %v148, %v147
    %v154 = vpack.c.b16 %v149, %v149
    %v159 = vunpack.c.l.b16 %v106
    %v160 = vunpack.c.h.b16 %v106
    %v161 = vunpack.c.l.b16 %v107
    %v162 = vunpack.c.h.b16 %v107
    %v163 = vunpack.c.l.b16 %v108
    %v164 = vunpack.c.h.b16 %v108
    %v165 = vunpack.c.l.b16 %v109
    %v166 = vunpack.c.h.b16 %v109
    %v167 = vpack.c.b16 %v163, %v159
    %v168 = vpack.c.b16 %v164, %v160
    %v169 = vpack.c.b16 %v165, %v161
    %v170 = vpack.c.b16 %v166, %v162
    %vm175 = vcmask 130048
    %v177 = vsel %vm175, %v150, 0
    %v180 = vsel %vm175, %v151, 0
    %v183 = vsel %vm175, %v152, 0
    %v186 = vsel %vm175, %v153, 0
    %v189 = vsel %vm175, %v154, 0
    %191 = vmatprep.subr.bf16.mxu0 %v168
    %192 = vmatpush1.bf16.msra.mxu0 %v167
    %193 = vmatprep.subr.bf16.mxu0 0
    %194 = vmatpush1.bf16.msra.mxu0 0
    %195 = vmatprep.subr.bf16.mxu0 0
    %196 = vmatpush1.bf16.msra.mxu0 0
    %197 = vmatprep.subr.bf16.mxu0 0
    %198 = vmatpush1.bf16.msra.mxu0 0
    %199 = vmatprep.subr.bf16.mxu0 0
    %200 = vmatpush1.bf16.msra.mxu0 0
    %201 = vmatprep.subr.bf16.mxu0 0
    %202 = vmatpush1.bf16.msra.mxu0 0
    %203 = vmatprep.subr.bf16.mxu0 0
    %204 = vmatpush1.bf16.msra.mxu0 0
    %205 = vmatprep.subr.bf16.mxu0 0
    %206 = vmatpush1.bf16.msra.mxu0 0
    %207 = vmatprep.subr.bf16.mxu0 0
    %208 = vmatpush1.bf16.msra.mxu0 0
    %209 = vmatprep.subr.bf16.mxu0 0
    %210 = vmatpush1.bf16.msra.mxu0 0
    %211 = vmatprep.subr.bf16.mxu0 0
    %212 = vmatpush1.bf16.msra.mxu0 0
    %213 = vmatprep.subr.bf16.mxu0 0
    %214 = vmatpush1.bf16.msra.mxu0 0
    %215 = vmatprep.subr.bf16.mxu0 0
    %216 = vmatpush1.bf16.msra.mxu0 0
    %217 = vmatprep.subr.bf16.mxu0 0
    %218 = vmatpush1.bf16.msra.mxu0 0
    %219 = vmatprep.subr.bf16.mxu0 0
    %220 = vmatpush1.bf16.msra.mxu0 0
    %221 = vmatprep.subr.bf16.mxu0 0
    %222 = vmatpush1.bf16.msra.mxu0 0
    %223 = vmatprep.mubr.bf16.mxu0 0
    %224 = vmatmul.mubr.bf16.gmra.mrb[0].mxu0 %v177
    %v225 = vpop.f32.mrb[0].mxu0
    %v226 = vadd.f32 %v115, %v225
    %v227 = vpop.f32.mrb[0].mxu0
    %v228 = vpop.f32.mrb[0].mxu0
    %v229 = vadd.f32 %v115, %v228
    %v230 = vpop.f32.mrb[0].mxu0
    %v231 = vadd.f32 %v119, %v230
    %232 = vmatprep.mubr.bf16.mxu0 0
    %233 = vmatmul.mubr.bf16.gmra.mrb[0].mxu0 %v180
    %v234 = vpop.f32.mrb[0].mxu0
    %v235 = vadd.f32 %v115, %v234
    %v236 = vpop.f32.mrb[0].mxu0
    %v237 = vadd.f32 %v119, %v236
    %v238 = vpop.f32.mrb[0].mxu0
    %v239 = vadd.f32 %v115, %v238
    %v240 = vpop.f32.mrb[0].mxu0
    %v241 = vadd.f32 %v119, %v240
    %242 = vmatprep.mubr.bf16.mxu0 0
    %243 = vmatmul.mubr.bf16.gmra.mrb[0].mxu0 %v183
    %v244 = vpop.f32.mrb[0].mxu0
    %v245 = vadd.f32 %v115, %v244
    %v246 = vpop.f32.mrb[0].mxu0
    %v247 = vadd.f32 %v119, %v246
    %v248 = vpop.f32.mrb[0].mxu0
    %v249 = vadd.f32 %v115, %v248
    %v250 = vpop.f32.mrb[0].mxu0
    %v251 = vadd.f32 %v119, %v250
    %252 = vmatprep.mubr.bf16.mxu0 0
    %253 = vmatmul.mubr.bf16.gmra.mrb[0].mxu0 %v186
    %v254 = vpop.f32.mrb[0].mxu0
    %v255 = vadd.f32 %v115, %v254
    %v256 = vpop.f32.mrb[0].mxu0
    %v257 = vadd.f32 %v119, %v256
    %v258 = vpop.f32.mrb[0].mxu0
    %v259 = vadd.f32 %v115, %v258
    %v260 = vpop.f32.mrb[0].mxu0
    %v261 = vadd.f32 %v119, %v260
    %262 = vmatprep.mubr.bf16.mxu0 0
    %263 = vmatmul.mubr.bf16.gmra.mrb[0].mxu0 %v189
    %v264 = vpop.f32.mrb[0].mxu0
    %v265 = vadd.f32 %v115, %v264
    %v266 = vpop.f32.mrb[0].mxu0
    %v267 = vadd.f32 %v119, %v266
    %v268 = vpop.f32.mrb[0].mxu0
    %v269 = vpop.f32.mrb[0].mxu0
    %270 = vdwg.mxu0
    %271 = vmatprep.subr.bf16.mxu0 %v170
    %272 = vmatpush1.bf16.msra.mxu0 %v169
    %273 = vmatprep.subr.bf16.mxu0 0
    %274 = vmatpush1.bf16.msra.mxu0 0
    %275 = vmatprep.subr.bf16.mxu0 0
    %276 = vmatpush1.bf16.msra.mxu0 0
    %277 = vmatprep.subr.bf16.mxu0 0
    %278 = vmatpush1.bf16.msra.mxu0 0
    %279 = vmatprep.subr.bf16.mxu0 0
    %280 = vmatpush1.bf16.msra.mxu0 0
    %281 = vmatprep.subr.bf16.mxu0 0
    %282 = vmatpush1.bf16.msra.mxu0 0
    %283 = vmatprep.subr.bf16.mxu0 0
    %284 = vmatpush1.bf16.msra.mxu0 0
    %285 = vmatprep.subr.bf16.mxu0 0
    %286 = vmatpush1.bf16.msra.mxu0 0
    %287 = vmatprep.subr.bf16.mxu0 0
    %288 = vmatpush1.bf16.msra.mxu0 0
    %289 = vmatprep.subr.bf16.mxu0 0
    %290 = vmatpush1.bf16.msra.mxu0 0
    %291 = vmatprep.subr.bf16.mxu0 0
    %292 = vmatpush1.bf16.msra.mxu0 0
    %293 = vmatprep.subr.bf16.mxu0 0
    %294 = vmatpush1.bf16.msra.mxu0 0
    %295 = vmatprep.subr.bf16.mxu0 0
    %296 = vmatpush1.bf16.msra.mxu0 0
    %297 = vmatprep.subr.bf16.mxu0 0
    %298 = vmatpush1.bf16.msra.mxu0 0
    %299 = vmatprep.subr.bf16.mxu0 0
    %300 = vmatpush1.bf16.msra.mxu0 0
    %301 = vmatprep.subr.bf16.mxu0 0
    %302 = vmatpush1.bf16.msra.mxu0 0
    %303 = vmatprep.mubr.bf16.mxu0 0
    %304 = vmatmul.mubr.bf16.gmra.mrb[0].mxu0 %v177
    %v305 = vpop.f32.mrb[0].mxu0
    %v306 = vadd.f32 %v123, %v305
    %v307 = vpop.f32.mrb[0].mxu0
    %v308 = vadd.f32 %v127, %v307
    %v309 = vpop.f32.mrb[0].mxu0
    %v310 = vadd.f32 %v123, %v309
    %v311 = vpop.f32.mrb[0].mxu0
    %v312 = vadd.f32 %v127, %v311
    %313 = vmatprep.mubr.bf16.mxu0 0
    %314 = vmatmul.mubr.bf16.gmra.mrb[0].mxu0 %v180
    %v315 = vpop.f32.mrb[0].mxu0
    %v316 = vadd.f32 %v123, %v315
    %v317 = vpop.f32.mrb[0].mxu0
    %v318 = vadd.f32 %v127, %v317
    %v319 = vpop.f32.mrb[0].mxu0
    %v320 = vadd.f32 %v123, %v319
    %v321 = vpop.f32.mrb[0].mxu0
    %v322 = vadd.f32 %v127, %v321
    %323 = vmatprep.mubr.bf16.mxu0 0
    %324 = vmatmul.mubr.bf16.gmra.mrb[0].mxu0 %v183
    %v325 = vpop.f32.mrb[0].mxu0
    %v326 = vadd.f32 %v123, %v325
    %v327 = vpop.f32.mrb[0].mxu0
    %v328 = vadd.f32 %v127, %v327
    %v329 = vpop.f32.mrb[0].mxu0
    %v330 = vadd.f32 %v123, %v329
    %v331 = vpop.f32.mrb[0].mxu0
    %v332 = vadd.f32 %v127, %v331
    %333 = vmatprep.mubr.bf16.mxu0 0
    %334 = vmatmul.mubr.bf16.gmra.mrb[0].mxu0 %v186
    %v335 = vpop.f32.mrb[0].mxu0
    %v336 = vadd.f32 %v123, %v335
    %v337 = vpop.f32.mrb[0].mxu0
    %v338 = vadd.f32 %v127, %v337
    %v339 = vpop.f32.mrb[0].mxu0
    %v340 = vadd.f32 %v123, %v339
    %v341 = vpop.f32.mrb[0].mxu0
    %v342 = vadd.f32 %v127, %v341
    %343 = vmatprep.mubr.bf16.mxu0 0
    %344 = vmatmul.mubr.bf16.gmra.mrb[0].mxu0 %v189
    %v345 = vpop.f32.mrb[0].mxu0
    %v346 = vadd.f32 %v123, %v345
    %v347 = vpop.f32.mrb[0].mxu0
    %v348 = vadd.f32 %v127, %v347
    %v349 = vpop.f32.mrb[0].mxu0
    %v350 = vpop.f32.mrb[0].mxu0
    %351 = vdwg.mxu0
    %v352 = vtanh.pop %v226
    %v353 = vtanh.pop %v306
    %v354 = vtanh.pop %v308
    %v355 = vmul.f32 %v352, %v47
    %v356 = vmul.f32 %v353, %v49
    %v357 = vmul.f32 %v354, %v50
    %v358 = vadd.f32 %v355, %v51
    %v359 = vadd.f32 %v356, %v53
    %v360 = vadd.f32 %v357, %v54
    %v361 = vmul.f32 %v358, %v360
    %v362 = vmul.f32 %v361, %v56
    %v363 = vtanh.pop %v362
    %v364 = vmul.f32 %v359, %v363
    %v365 = vpack.c.bf16 %v364, %v364
    %v398 = vunpack.c.l.b16 %v57
    %v399 = vunpack.c.h.b16 %v57
    %v400 = vunpack.c.l.b16 %v58
    %v401 = vunpack.c.h.b16 %v58
    %v402 = vunpack.c.l.b16 %v59
    %v403 = vunpack.c.h.b16 %v59
    %v404 = vunpack.c.l.b16 %v60
    %v405 = vunpack.c.h.b16 %v60
    %v406 = vunpack.c.l.b16 %v61
    %v407 = vunpack.c.h.b16 %v61
    %v408 = vunpack.c.l.b16 %v62
    %v409 = vunpack.c.h.b16 %v62
    %v410 = vunpack.c.l.b16 %v63
    %v411 = vunpack.c.h.b16 %v63
    %v412 = vunpack.c.l.b16 %v64
    %v413 = vunpack.c.h.b16 %v64
    %v414 = vunpack.c.l.b16 %v65
    %v415 = vunpack.c.h.b16 %v65
    %v416 = vunpack.c.l.b16 %v66
    %v417 = vunpack.c.h.b16 %v66
    %v418 = vunpack.c.l.b16 %v67
    %v419 = vunpack.c.h.b16 %v67
    %v420 = vunpack.c.l.b16 %v68
    %v421 = vunpack.c.h.b16 %v68
    %v422 = vunpack.c.l.b16 %v69
    %v423 = vunpack.c.h.b16 %v69
    %v424 = vunpack.c.l.b16 %v70
    %v425 = vunpack.c.h.b16 %v70
    %v426 = vunpack.c.l.b16 %v71
    %v427 = vunpack.c.h.b16 %v71
    %v428 = vunpack.c.l.b16 %v72
    %v429 = vunpack.c.h.b16 %v72
    %v430 = vunpack.c.l.b16 %v73
    %v431 = vunpack.c.h.b16 %v73
    %v432 = vunpack.c.l.b16 %v74
    %v433 = vunpack.c.h.b16 %v74
    %v434 = vunpack.c.l.b16 %v75
    %v435 = vunpack.c.h.b16 %v75
    %v436 = vunpack.c.l.b16 %v76
    %v437 = vunpack.c.h.b16 %v76
    %v438 = vunpack.c.l.b16 %v77
    %v439 = vunpack.c.h.b16 %v77
    %v440 = vunpack.c.l.b16 %v78
    %v441 = vunpack.c.h.b16 %v78
    %v442 = vunpack.c.l.b16 %v79
    %v443 = vunpack.c.h.b16 %v79
    %v444 = vunpack.c.l.b16 %v80
    %v445 = vunpack.c.h.b16 %v80
    %v446 = vunpack.c.l.b16 %v81
    %v447 = vunpack.c.h.b16 %v81
    %v448 = vunpack.c.l.b16 %v82
    %v449 = vunpack.c.h.b16 %v82
    %v450 = vunpack.c.l.b16 %v83
    %v451 = vunpack.c.h.b16 %v83
    %v452 = vunpack.c.l.b16 %v84
    %v453 = vunpack.c.h.b16 %v84
    %v454 = vunpack.c.l.b16 %v85
    %v455 = vunpack.c.h.b16 %v85
    %v456 = vunpack.c.l.b16 %v86
    %v457 = vunpack.c.h.b16 %v86
    %v458 = vunpack.c.l.b16 %v87
    %v459 = vunpack.c.h.b16 %v87
    %v460 = vunpack.c.l.b16 %v88
    %v461 = vunpack.c.h.b16 %v88
    %v462 = vpack.c.b16 %v402, %v398
    %v463 = vpack.c.b16 %v403, %v399
    %v464 = vpack.c.b16 %v404, %v400
    %v465 = vpack.c.b16 %v405, %v401
    %v466 = vpack.c.b16 %v410, %v406
    %v467 = vpack.c.b16 %v411, %v407
    %v468 = vpack.c.b16 %v412, %v408
    %v469 = vpack.c.b16 %v413, %v409
    %v470 = vpack.c.b16 %v418, %v414
    %v471 = vpack.c.b16 %v419, %v415
    %v472 = vpack.c.b16 %v420, %v416
    %v473 = vpack.c.b16 %v421, %v417
    %v474 = vpack.c.b16 %v426, %v422
    %v475 = vpack.c.b16 %v427, %v423
    %v476 = vpack.c.b16 %v428, %v424
    %v477 = vpack.c.b16 %v429, %v425
    %v478 = vpack.c.b16 %v434, %v430
    %v479 = vpack.c.b16 %v435, %v431
    %v480 = vpack.c.b16 %v436, %v432
    %v481 = vpack.c.b16 %v437, %v433
    %v482 = vpack.c.b16 %v442, %v438
    %v483 = vpack.c.b16 %v443, %v439
    %v484 = vpack.c.b16 %v444, %v440
    %v485 = vpack.c.b16 %v445, %v441
    %v486 = vpack.c.b16 %v450, %v446
    %v487 = vpack.c.b16 %v451, %v447
    %v488 = vpack.c.b16 %v452, %v448
    %v489 = vpack.c.b16 %v453, %v449
    %v490 = vpack.c.b16 %v458, %v454
    %v491 = vpack.c.b16 %v459, %v455
    %v492 = vpack.c.b16 %v460, %v456
    %v493 = vpack.c.b16 %v461, %v457
    %526 = vmatprep.subr.bf16.mxu0 %v463
    %527 = vmatpush1.bf16.msra.mxu0 %v462
    %528 = vmatprep.subr.bf16.mxu0 %v467
    %529 = vmatpush1.bf16.msra.mxu0 %v466
    %530 = vmatprep.subr.bf16.mxu0 %v471
    %531 = vmatpush1.bf16.msra.mxu0 %v470
    %532 = vmatprep.subr.bf16.mxu0 %v475
    %533 = vmatpush1.bf16.msra.mxu0 %v474
    %534 = vmatprep.subr.bf16.mxu0 %v479
    %535 = vmatpush1.bf16.msra.mxu0 %v478
    %536 = vmatprep.subr.bf16.mxu0 %v483
    %537 = vmatpush1.bf16.msra.mxu0 %v482
    %538 = vmatprep.subr.bf16.mxu0 %v487
    %539 = vmatpush1.bf16.msra.mxu0 %v486
    %540 = vmatprep.subr.bf16.mxu0 %v491
    %541 = vmatpush1.bf16.msra.mxu0 %v490
    %542 = vmatprep.subr.bf16.mxu0 0
    %543 = vmatpush1.bf16.msra.mxu0 0
    %544 = vmatprep.subr.bf16.mxu0 0
    %545 = vmatpush1.bf16.msra.mxu0 0
    %546 = vmatprep.subr.bf16.mxu0 0
    %547 = vmatpush1.bf16.msra.mxu0 0
    %548 = vmatprep.subr.bf16.mxu0 0
    %549 = vmatpush1.bf16.msra.mxu0 0
    %550 = vmatprep.subr.bf16.mxu0 0
    %551 = vmatpush1.bf16.msra.mxu0 0
    %552 = vmatprep.subr.bf16.mxu0 0
    %553 = vmatpush1.bf16.msra.mxu0 0
    %554 = vmatprep.subr.bf16.mxu0 0
    %555 = vmatpush1.bf16.msra.mxu0 0
    %556 = vmatprep.subr.bf16.mxu0 0
    %557 = vmatpush1.bf16.msra.mxu0 0
    %558 = vmatprep.mubr.bf16.mxu0 0
    %559 = vmatmul.mubr.bf16.gmra.mrb[0].mxu0 %v365
    %v560 = vpop.f32.mrb[0].mxu0
    %v561 = vadd.f32 %v229, %v560
    %v562 = vpop.f32.mrb[0].mxu0
    %v563 = vadd.f32 %v231, %v562
    %v564 = vpop.f32.mrb[0].mxu0
    %v565 = vpop.f32.mrb[0].mxu0
    %566 = vdwg.mxu0
    %567 = vmatprep.subr.bf16.mxu0 %v465
    %568 = vmatpush1.bf16.msra.mxu0 %v464
    %569 = vmatprep.subr.bf16.mxu0 %v469
    %570 = vmatpush1.bf16.msra.mxu0 %v468
    %571 = vmatprep.subr.bf16.mxu0 %v473
    %572 = vmatpush1.bf16.msra.mxu0 %v472
    %573 = vmatprep.subr.bf16.mxu0 %v477
    %574 = vmatpush1.bf16.msra.mxu0 %v476
    %575 = vmatprep.subr.bf16.mxu0 %v481
    %576 = vmatpush1.bf16.msra.mxu0 %v480
    %577 = vmatprep.subr.bf16.mxu0 %v485
    %578 = vmatpush1.bf16.msra.mxu0 %v484
    %579 = vmatprep.subr.bf16.mxu0 %v489
    %580 = vmatpush1.bf16.msra.mxu0 %v488
    %581 = vmatprep.subr.bf16.mxu0 %v493
    %582 = vmatpush1.bf16.msra.mxu0 %v492
    %583 = vmatprep.subr.bf16.mxu0 0
    %584 = vmatpush1.bf16.msra.mxu0 0
    %585 = vmatprep.subr.bf16.mxu0 0
    %586 = vmatpush1.bf16.msra.mxu0 0
    %587 = vmatprep.subr.bf16.mxu0 0
    %588 = vmatpush1.bf16.msra.mxu0 0
    %589 = vmatprep.subr.bf16.mxu0 0
    %590 = vmatpush1.bf16.msra.mxu0 0
    %591 = vmatprep.subr.bf16.mxu0 0
    %592 = vmatpush1.bf16.msra.mxu0 0
    %593 = vmatprep.subr.bf16.mxu0 0
    %594 = vmatpush1.bf16.msra.mxu0 0
    %595 = vmatprep.subr.bf16.mxu0 0
    %596 = vmatpush1.bf16.msra.mxu0 0
    %597 = vmatprep.subr.bf16.mxu0 0
    %598 = vmatpush1.bf16.msra.mxu0 0
    %599 = vmatprep.mubr.bf16.mxu0 0
    %600 = vmatmul.mubr.bf16.gmra.mrb[0].mxu0 %v365
    %v601 = vpop.f32.mrb[0].mxu0
    %v602 = vadd.f32 %v310, %v601
    %v603 = vpop.f32.mrb[0].mxu0
    %v604 = vadd.f32 %v312, %v603
    %v605 = vpop.f32.mrb[0].mxu0
    %v606 = vpop.f32.mrb[0].mxu0
    %607 = vdwg.mxu0
    %v608 = vtanh.pop %v561
    %v609 = vtanh.pop %v563
    %v610 = vtanh.pop %v602
    %v611 = vtanh.pop %v604
    %v612 = vmul.f32 %v608, %v47
    %v613 = vmul.f32 %v609, %v48
    %v614 = vmul.f32 %v610, %v49
    %v615 = vmul.f32 %v611, %v50
    %v616 = vadd.f32 %v612, %v51
    %v617 = vadd.f32 %v613, %v52
    %v618 = vadd.f32 %v614, %v53
    %v619 = vadd.f32 %v615, %v54
    %v620 = vmul.f32 %v617, %v362
    %v621 = vmul.f32 %v616, %v619
    %v622 = vadd.f32 %v620, %v621
    %v623 = vtanh.pop %v622
    %v624 = vmul.f32 %v618, %v623
    %v625 = vadd.f32 %v624, 0.0
    %v626 = vpack.c.bf16 %v624, %v624
    %627 = vmatprep.subr.bf16.mxu0 %v463
    %628 = vmatpush1.bf16.msra.mxu0 %v462
    %629 = vmatprep.subr.bf16.mxu0 %v467
    %630 = vmatpush1.bf16.msra.mxu0 %v466
    %631 = vmatprep.subr.bf16.mxu0 %v471
    %632 = vmatpush1.bf16.msra.mxu0 %v470
    %633 = vmatprep.subr.bf16.mxu0 %v475
    %634 = vmatpush1.bf16.msra.mxu0 %v474
    %635 = vmatprep.subr.bf16.mxu0 %v479
    %636 = vmatpush1.bf16.msra.mxu0 %v478
    %637 = vmatprep.subr.bf16.mxu0 %v483
    %638 = vmatpush1.bf16.msra.mxu0 %v482
    %639 = vmatprep.subr.bf16.mxu0 %v487
    %640 = vmatpush1.bf16.msra.mxu0 %v486
    %641 = vmatprep.subr.bf16.mxu0 %v491
    %642 = vmatpush1.bf16.msra.mxu0 %v490
    %643 = vmatprep.subr.bf16.mxu0 0
    %644 = vmatpush1.bf16.msra.mxu0 0
    %645 = vmatprep.subr.bf16.mxu0 0
    %646 = vmatpush1.bf16.msra.mxu0 0
    %647 = vmatprep.subr.bf16.mxu0 0
    %648 = vmatpush1.bf16.msra.mxu0 0
    %649 = vmatprep.subr.bf16.mxu0 0
    %650 = vmatpush1.bf16.msra.mxu0 0
    %651 = vmatprep.subr.bf16.mxu0 0
    %652 = vmatpush1.bf16.msra.mxu0 0
    %653 = vmatprep.subr.bf16.mxu0 0
    %654 = vmatpush1.bf16.msra.mxu0 0
    %655 = vmatprep.subr.bf16.mxu0 0
    %656 = vmatpush1.bf16.msra.mxu0 0
    %657 = vmatprep.subr.bf16.mxu0 0
    %658 = vmatpush1.bf16.msra.mxu0 0
    %659 = vmatprep.mubr.bf16.mxu0 0
    %660 = vmatmul.mubr.bf16.gmra.mrb[0].mxu0 %v626
    %v661 = vpop.f32.mrb[0].mxu0
    %v662 = vadd.f32 %v235, %v661
    %v663 = vpop.f32.mrb[0].mxu0
    %v664 = vadd.f32 %v237, %v663
    %v665 = vpop.f32.mrb[0].mxu0
    %v666 = vpop.f32.mrb[0].mxu0
    %667 = vdwg.mxu0
    %668 = vmatprep.subr.bf16.mxu0 %v465
    %669 = vmatpush1.bf16.msra.mxu0 %v464
    %670 = vmatprep.subr.bf16.mxu0 %v469
    %671 = vmatpush1.bf16.msra.mxu0 %v468
    %672 = vmatprep.subr.bf16.mxu0 %v473
    %673 = vmatpush1.bf16.msra.mxu0 %v472
    %674 = vmatprep.subr.bf16.mxu0 %v477
    %675 = vmatpush1.bf16.msra.mxu0 %v476
    %676 = vmatprep.subr.bf16.mxu0 %v481
    %677 = vmatpush1.bf16.msra.mxu0 %v480
    %678 = vmatprep.subr.bf16.mxu0 %v485
    %679 = vmatpush1.bf16.msra.mxu0 %v484
    %680 = vmatprep.subr.bf16.mxu0 %v489
    %681 = vmatpush1.bf16.msra.mxu0 %v488
    %682 = vmatprep.subr.bf16.mxu0 %v493
    %683 = vmatpush1.bf16.msra.mxu0 %v492
    %684 = vmatprep.subr.bf16.mxu0 0
    %685 = vmatpush1.bf16.msra.mxu0 0
    %686 = vmatprep.subr.bf16.mxu0 0
    %687 = vmatpush1.bf16.msra.mxu0 0
    %688 = vmatprep.subr.bf16.mxu0 0
    %689 = vmatpush1.bf16.msra.mxu0 0
    %690 = vmatprep.subr.bf16.mxu0 0
    %691 = vmatpush1.bf16.msra.mxu0 0
    %692 = vmatprep.subr.bf16.mxu0 0
    %693 = vmatpush1.bf16.msra.mxu0 0
    %694 = vmatprep.subr.bf16.mxu0 0
    %695 = vmatpush1.bf16.msra.mxu0 0
    %696 = vmatprep.subr.bf16.mxu0 0
    %697 = vmatpush1.bf16.msra.mxu0 0
    %698 = vmatprep.subr.bf16.mxu0 0
    %699 = vmatpush1.bf16.msra.mxu0 0
    %700 = vmatprep.mubr.bf16.mxu0 0
    %701 = vmatmul.mubr.bf16.gmra.mrb[0].mxu0 %v626
    %v702 = vpop.f32.mrb[0].mxu0
    %v703 = vadd.f32 %v316, %v702
    %v704 = vpop.f32.mrb[0].mxu0
    %v705 = vadd.f32 %v318, %v704
    %v706 = vpop.f32.mrb[0].mxu0
    %v707 = vpop.f32.mrb[0].mxu0
    %708 = vdwg.mxu0
    %v709 = vtanh.pop %v662
    %v710 = vtanh.pop %v664
    %v711 = vtanh.pop %v703
    %v712 = vtanh.pop %v705
    %v713 = vmul.f32 %v709, %v47
    %v714 = vmul.f32 %v710, %v48
    %v715 = vmul.f32 %v711, %v49
    %v716 = vmul.f32 %v712, %v50
    %v717 = vadd.f32 %v713, %v51
    %v718 = vadd.f32 %v714, %v52
    %v719 = vadd.f32 %v715, %v53
    %v720 = vadd.f32 %v716, %v54
    %v721 = vmul.f32 %v718, %v622
    %v722 = vmul.f32 %v717, %v720
    %v723 = vadd.f32 %v721, %v722
    %v724 = vtanh.pop %v723
    %v725 = vmul.f32 %v719, %v724
    %v726 = vadd.f32 %v625, %v725
    %v727 = vpack.c.bf16 %v725, %v725
    %728 = vmatprep.subr.bf16.mxu0 %v463
    %729 = vmatpush1.bf16.msra.mxu0 %v462
    %730 = vmatprep.subr.bf16.mxu0 %v467
    %731 = vmatpush1.bf16.msra.mxu0 %v466
    %732 = vmatprep.subr.bf16.mxu0 %v471
    %733 = vmatpush1.bf16.msra.mxu0 %v470
    %734 = vmatprep.subr.bf16.mxu0 %v475
    %735 = vmatpush1.bf16.msra.mxu0 %v474
    %736 = vmatprep.subr.bf16.mxu0 %v479
    %737 = vmatpush1.bf16.msra.mxu0 %v478
    %738 = vmatprep.subr.bf16.mxu0 %v483
    %739 = vmatpush1.bf16.msra.mxu0 %v482
    %740 = vmatprep.subr.bf16.mxu0 %v487
    %741 = vmatpush1.bf16.msra.mxu0 %v486
    %742 = vmatprep.subr.bf16.mxu0 %v491
    %743 = vmatpush1.bf16.msra.mxu0 %v490
    %744 = vmatprep.subr.bf16.mxu0 0
    %745 = vmatpush1.bf16.msra.mxu0 0
    %746 = vmatprep.subr.bf16.mxu0 0
    %747 = vmatpush1.bf16.msra.mxu0 0
    %748 = vmatprep.subr.bf16.mxu0 0
    %749 = vmatpush1.bf16.msra.mxu0 0
    %750 = vmatprep.subr.bf16.mxu0 0
    %751 = vmatpush1.bf16.msra.mxu0 0
    %752 = vmatprep.subr.bf16.mxu0 0
    %753 = vmatpush1.bf16.msra.mxu0 0
    %754 = vmatprep.subr.bf16.mxu0 0
    %755 = vmatpush1.bf16.msra.mxu0 0
    %756 = vmatprep.subr.bf16.mxu0 0
    %757 = vmatpush1.bf16.msra.mxu0 0
    %758 = vmatprep.subr.bf16.mxu0 0
    %759 = vmatpush1.bf16.msra.mxu0 0
    %760 = vmatprep.mubr.bf16.mxu0 0
    %761 = vmatmul.mubr.bf16.gmra.mrb[0].mxu0 %v727
    %v762 = vpop.f32.mrb[0].mxu0
    %v763 = vadd.f32 %v239, %v762
    %v764 = vpop.f32.mrb[0].mxu0
    %v765 = vadd.f32 %v241, %v764
    %v766 = vpop.f32.mrb[0].mxu0
    %v767 = vpop.f32.mrb[0].mxu0
    %768 = vdwg.mxu0
    %769 = vmatprep.subr.bf16.mxu0 %v465
    %770 = vmatpush1.bf16.msra.mxu0 %v464
    %771 = vmatprep.subr.bf16.mxu0 %v469
    %772 = vmatpush1.bf16.msra.mxu0 %v468
    %773 = vmatprep.subr.bf16.mxu0 %v473
    %774 = vmatpush1.bf16.msra.mxu0 %v472
    %775 = vmatprep.subr.bf16.mxu0 %v477
    %776 = vmatpush1.bf16.msra.mxu0 %v476
    %777 = vmatprep.subr.bf16.mxu0 %v481
    %778 = vmatpush1.bf16.msra.mxu0 %v480
    %779 = vmatprep.subr.bf16.mxu0 %v485
    %780 = vmatpush1.bf16.msra.mxu0 %v484
    %781 = vmatprep.subr.bf16.mxu0 %v489
    %782 = vmatpush1.bf16.msra.mxu0 %v488
    %783 = vmatprep.subr.bf16.mxu0 %v493
    %784 = vmatpush1.bf16.msra.mxu0 %v492
    %785 = vmatprep.subr.bf16.mxu0 0
    %786 = vmatpush1.bf16.msra.mxu0 0
    %787 = vmatprep.subr.bf16.mxu0 0
    %788 = vmatpush1.bf16.msra.mxu0 0
    %789 = vmatprep.subr.bf16.mxu0 0
    %790 = vmatpush1.bf16.msra.mxu0 0
    %791 = vmatprep.subr.bf16.mxu0 0
    %792 = vmatpush1.bf16.msra.mxu0 0
    %793 = vmatprep.subr.bf16.mxu0 0
    %794 = vmatpush1.bf16.msra.mxu0 0
    %795 = vmatprep.subr.bf16.mxu0 0
    %796 = vmatpush1.bf16.msra.mxu0 0
    %797 = vmatprep.subr.bf16.mxu0 0
    %798 = vmatpush1.bf16.msra.mxu0 0
    %799 = vmatprep.subr.bf16.mxu0 0
    %800 = vmatpush1.bf16.msra.mxu0 0
    %801 = vmatprep.mubr.bf16.mxu0 0
    %802 = vmatmul.mubr.bf16.gmra.mrb[0].mxu0 %v727
    %v803 = vpop.f32.mrb[0].mxu0
    %v804 = vadd.f32 %v320, %v803
    %v805 = vpop.f32.mrb[0].mxu0
    %v806 = vadd.f32 %v322, %v805
    %v807 = vpop.f32.mrb[0].mxu0
    %v808 = vpop.f32.mrb[0].mxu0
    %809 = vdwg.mxu0
    %v810 = vtanh.pop %v763
    %v811 = vtanh.pop %v765
    %v812 = vtanh.pop %v804
    %v813 = vtanh.pop %v806
    %v814 = vmul.f32 %v810, %v47
    %v815 = vmul.f32 %v811, %v48
    %v816 = vmul.f32 %v812, %v49
    %v817 = vmul.f32 %v813, %v50
    %v818 = vadd.f32 %v814, %v51
    %v819 = vadd.f32 %v815, %v52
    %v820 = vadd.f32 %v816, %v53
    %v821 = vadd.f32 %v817, %v54
    %v822 = vmul.f32 %v819, %v723
    %v823 = vmul.f32 %v818, %v821
    %v824 = vadd.f32 %v822, %v823
    %v825 = vtanh.pop %v824
    %v826 = vmul.f32 %v820, %v825
    %v827 = vadd.f32 %v726, %v826
    %v828 = vpack.c.bf16 %v826, %v826
    %829 = vmatprep.subr.bf16.mxu0 %v463
    %830 = vmatpush1.bf16.msra.mxu0 %v462
    %831 = vmatprep.subr.bf16.mxu0 %v467
    %832 = vmatpush1.bf16.msra.mxu0 %v466
    %833 = vmatprep.subr.bf16.mxu0 %v471
    %834 = vmatpush1.bf16.msra.mxu0 %v470
    %835 = vmatprep.subr.bf16.mxu0 %v475
    %836 = vmatpush1.bf16.msra.mxu0 %v474
    %837 = vmatprep.subr.bf16.mxu0 %v479
    %838 = vmatpush1.bf16.msra.mxu0 %v478
    %839 = vmatprep.subr.bf16.mxu0 %v483
    %840 = vmatpush1.bf16.msra.mxu0 %v482
    %841 = vmatprep.subr.bf16.mxu0 %v487
    %842 = vmatpush1.bf16.msra.mxu0 %v486
    %843 = vmatprep.subr.bf16.mxu0 %v491
    %844 = vmatpush1.bf16.msra.mxu0 %v490
    %845 = vmatprep.subr.bf16.mxu0 0
    %846 = vmatpush1.bf16.msra.mxu0 0
    %847 = vmatprep.subr.bf16.mxu0 0
    %848 = vmatpush1.bf16.msra.mxu0 0
    %849 = vmatprep.subr.bf16.mxu0 0
    %850 = vmatpush1.bf16.msra.mxu0 0
    %851 = vmatprep.subr.bf16.mxu0 0
    %852 = vmatpush1.bf16.msra.mxu0 0
    %853 = vmatprep.subr.bf16.mxu0 0
    %854 = vmatpush1.bf16.msra.mxu0 0
    %855 = vmatprep.subr.bf16.mxu0 0
    %856 = vmatpush1.bf16.msra.mxu0 0
    %857 = vmatprep.subr.bf16.mxu0 0
    %858 = vmatpush1.bf16.msra.mxu0 0
    %859 = vmatprep.subr.bf16.mxu0 0
    %860 = vmatpush1.bf16.msra.mxu0 0
    %861 = vmatprep.mubr.bf16.mxu0 0
    %862 = vmatmul.mubr.bf16.gmra.mrb[0].mxu0 %v828
    %v863 = vpop.f32.mrb[0].mxu0
    %v864 = vadd.f32 %v245, %v863
    %v865 = vpop.f32.mrb[0].mxu0
    %v866 = vadd.f32 %v247, %v865
    %v867 = vpop.f32.mrb[0].mxu0
    %v868 = vpop.f32.mrb[0].mxu0
    %869 = vdwg.mxu0
    %870 = vmatprep.subr.bf16.mxu0 %v465
    %871 = vmatpush1.bf16.msra.mxu0 %v464
    %872 = vmatprep.subr.bf16.mxu0 %v469
    %873 = vmatpush1.bf16.msra.mxu0 %v468
    %874 = vmatprep.subr.bf16.mxu0 %v473
    %875 = vmatpush1.bf16.msra.mxu0 %v472
    %876 = vmatprep.subr.bf16.mxu0 %v477
    %877 = vmatpush1.bf16.msra.mxu0 %v476
    %878 = vmatprep.subr.bf16.mxu0 %v481
    %879 = vmatpush1.bf16.msra.mxu0 %v480
    %880 = vmatprep.subr.bf16.mxu0 %v485
    %881 = vmatpush1.bf16.msra.mxu0 %v484
    %882 = vmatprep.subr.bf16.mxu0 %v489
    %883 = vmatpush1.bf16.msra.mxu0 %v488
    %884 = vmatprep.subr.bf16.mxu0 %v493
    %885 = vmatpush1.bf16.msra.mxu0 %v492
    %886 = vmatprep.subr.bf16.mxu0 0
    %887 = vmatpush1.bf16.msra.mxu0 0
    %888 = vmatprep.subr.bf16.mxu0 0
    %889 = vmatpush1.bf16.msra.mxu0 0
    %890 = vmatprep.subr.bf16.mxu0 0
    %891 = vmatpush1.bf16.msra.mxu0 0
    %892 = vmatprep.subr.bf16.mxu0 0
    %893 = vmatpush1.bf16.msra.mxu0 0
    %894 = vmatprep.subr.bf16.mxu0 0
    %895 = vmatpush1.bf16.msra.mxu0 0
    %896 = vmatprep.subr.bf16.mxu0 0
    %897 = vmatpush1.bf16.msra.mxu0 0
    %898 = vmatprep.subr.bf16.mxu0 0
    %899 = vmatpush1.bf16.msra.mxu0 0
    %900 = vmatprep.subr.bf16.mxu0 0
    %901 = vmatpush1.bf16.msra.mxu0 0
    %902 = vmatprep.mubr.bf16.mxu0 0
    %903 = vmatmul.mubr.bf16.gmra.mrb[0].mxu0 %v828
    %v904 = vpop.f32.mrb[0].mxu0
    %v905 = vadd.f32 %v326, %v904
    %v906 = vpop.f32.mrb[0].mxu0
    %v907 = vadd.f32 %v328, %v906
    %v908 = vpop.f32.mrb[0].mxu0
    %v909 = vpop.f32.mrb[0].mxu0
    %910 = vdwg.mxu0
    %v911 = vtanh.pop %v864
    %v912 = vtanh.pop %v866
    %v913 = vtanh.pop %v905
    %v914 = vtanh.pop %v907
    %v915 = vmul.f32 %v911, %v47
    %v916 = vmul.f32 %v912, %v48
    %v917 = vmul.f32 %v913, %v49
    %v918 = vmul.f32 %v914, %v50
    %v919 = vadd.f32 %v915, %v51
    %v920 = vadd.f32 %v916, %v52
    %v921 = vadd.f32 %v917, %v53
    %v922 = vadd.f32 %v918, %v54
    %v923 = vmul.f32 %v920, %v824
    %v924 = vmul.f32 %v919, %v922
    %v925 = vadd.f32 %v923, %v924
    %v926 = vtanh.pop %v925
    %v927 = vmul.f32 %v921, %v926
    %v928 = vadd.f32 %v827, %v927
    %v929 = vpack.c.bf16 %v927, %v927
    %930 = vmatprep.subr.bf16.mxu0 %v463
    %931 = vmatpush1.bf16.msra.mxu0 %v462
    %932 = vmatprep.subr.bf16.mxu0 %v467
    %933 = vmatpush1.bf16.msra.mxu0 %v466
    %934 = vmatprep.subr.bf16.mxu0 %v471
    %935 = vmatpush1.bf16.msra.mxu0 %v470
    %936 = vmatprep.subr.bf16.mxu0 %v475
    %937 = vmatpush1.bf16.msra.mxu0 %v474
    %938 = vmatprep.subr.bf16.mxu0 %v479
    %939 = vmatpush1.bf16.msra.mxu0 %v478
    %940 = vmatprep.subr.bf16.mxu0 %v483
    %941 = vmatpush1.bf16.msra.mxu0 %v482
    %942 = vmatprep.subr.bf16.mxu0 %v487
    %943 = vmatpush1.bf16.msra.mxu0 %v486
    %944 = vmatprep.subr.bf16.mxu0 %v491
    %945 = vmatpush1.bf16.msra.mxu0 %v490
    %946 = vmatprep.subr.bf16.mxu0 0
    %947 = vmatpush1.bf16.msra.mxu0 0
    %948 = vmatprep.subr.bf16.mxu0 0
    %949 = vmatpush1.bf16.msra.mxu0 0
    %950 = vmatprep.subr.bf16.mxu0 0
    %951 = vmatpush1.bf16.msra.mxu0 0
    %952 = vmatprep.subr.bf16.mxu0 0
    %953 = vmatpush1.bf16.msra.mxu0 0
    %954 = vmatprep.subr.bf16.mxu0 0
    %955 = vmatpush1.bf16.msra.mxu0 0
    %956 = vmatprep.subr.bf16.mxu0 0
    %957 = vmatpush1.bf16.msra.mxu0 0
    %958 = vmatprep.subr.bf16.mxu0 0
    %959 = vmatpush1.bf16.msra.mxu0 0
    %960 = vmatprep.subr.bf16.mxu0 0
    %961 = vmatpush1.bf16.msra.mxu0 0
    %962 = vmatprep.mubr.bf16.mxu0 0
    %963 = vmatmul.mubr.bf16.gmra.mrb[0].mxu0 %v929
    %v964 = vpop.f32.mrb[0].mxu0
    %v965 = vadd.f32 %v249, %v964
    %v966 = vpop.f32.mrb[0].mxu0
    %v967 = vadd.f32 %v251, %v966
    %v968 = vpop.f32.mrb[0].mxu0
    %v969 = vpop.f32.mrb[0].mxu0
    %970 = vdwg.mxu0
    %971 = vmatprep.subr.bf16.mxu0 %v465
    %972 = vmatpush1.bf16.msra.mxu0 %v464
    %973 = vmatprep.subr.bf16.mxu0 %v469
    %974 = vmatpush1.bf16.msra.mxu0 %v468
    %975 = vmatprep.subr.bf16.mxu0 %v473
    %976 = vmatpush1.bf16.msra.mxu0 %v472
    %977 = vmatprep.subr.bf16.mxu0 %v477
    %978 = vmatpush1.bf16.msra.mxu0 %v476
    %979 = vmatprep.subr.bf16.mxu0 %v481
    %980 = vmatpush1.bf16.msra.mxu0 %v480
    %981 = vmatprep.subr.bf16.mxu0 %v485
    %982 = vmatpush1.bf16.msra.mxu0 %v484
    %983 = vmatprep.subr.bf16.mxu0 %v489
    %984 = vmatpush1.bf16.msra.mxu0 %v488
    %985 = vmatprep.subr.bf16.mxu0 %v493
    %986 = vmatpush1.bf16.msra.mxu0 %v492
    %987 = vmatprep.subr.bf16.mxu0 0
    %988 = vmatpush1.bf16.msra.mxu0 0
    %989 = vmatprep.subr.bf16.mxu0 0
    %990 = vmatpush1.bf16.msra.mxu0 0
    %991 = vmatprep.subr.bf16.mxu0 0
    %992 = vmatpush1.bf16.msra.mxu0 0
    %993 = vmatprep.subr.bf16.mxu0 0
    %994 = vmatpush1.bf16.msra.mxu0 0
    %995 = vmatprep.subr.bf16.mxu0 0
    %996 = vmatpush1.bf16.msra.mxu0 0
    %997 = vmatprep.subr.bf16.mxu0 0
    %998 = vmatpush1.bf16.msra.mxu0 0
    %999 = vmatprep.subr.bf16.mxu0 0
    %1000 = vmatpush1.bf16.msra.mxu0 0
    %1001 = vmatprep.subr.bf16.mxu0 0
    %1002 = vmatpush1.bf16.msra.mxu0 0
    %1003 = vmatprep.mubr.bf16.mxu0 0
    %1004 = vmatmul.mubr.bf16.gmra.mrb[0].mxu0 %v929
    %v1005 = vpop.f32.mrb[0].mxu0
    %v1006 = vadd.f32 %v330, %v1005
    %v1007 = vpop.f32.mrb[0].mxu0
    %v1008 = vadd.f32 %v332, %v1007
    %v1009 = vpop.f32.mrb[0].mxu0
    %v1010 = vpop.f32.mrb[0].mxu0
    %1011 = vdwg.mxu0
    %v1012 = vtanh.pop %v965
    %v1013 = vtanh.pop %v967
    %v1014 = vtanh.pop %v1006
    %v1015 = vtanh.pop %v1008
    %v1016 = vmul.f32 %v1012, %v47
    %v1017 = vmul.f32 %v1013, %v48
    %v1018 = vmul.f32 %v1014, %v49
    %v1019 = vmul.f32 %v1015, %v50
    %v1020 = vadd.f32 %v1016, %v51
    %v1021 = vadd.f32 %v1017, %v52
    %v1022 = vadd.f32 %v1018, %v53
    %v1023 = vadd.f32 %v1019, %v54
    %v1024 = vmul.f32 %v1021, %v925
    %v1025 = vmul.f32 %v1020, %v1023
    %v1026 = vadd.f32 %v1024, %v1025
    %v1027 = vtanh.pop %v1026
    %v1028 = vmul.f32 %v1022, %v1027
    %v1029 = vadd.f32 %v928, %v1028
    %v1030 = vpack.c.bf16 %v1028, %v1028
    %1031 = vmatprep.subr.bf16.mxu0 %v463
    %1032 = vmatpush1.bf16.msra.mxu0 %v462
    %1033 = vmatprep.subr.bf16.mxu0 %v467
    %1034 = vmatpush1.bf16.msra.mxu0 %v466
    %1035 = vmatprep.subr.bf16.mxu0 %v471
    %1036 = vmatpush1.bf16.msra.mxu0 %v470
    %1037 = vmatprep.subr.bf16.mxu0 %v475
    %1038 = vmatpush1.bf16.msra.mxu0 %v474
    %1039 = vmatprep.subr.bf16.mxu0 %v479
    %1040 = vmatpush1.bf16.msra.mxu0 %v478
    %1041 = vmatprep.subr.bf16.mxu0 %v483
    %1042 = vmatpush1.bf16.msra.mxu0 %v482
    %1043 = vmatprep.subr.bf16.mxu0 %v487
    %1044 = vmatpush1.bf16.msra.mxu0 %v486
    %1045 = vmatprep.subr.bf16.mxu0 %v491
    %1046 = vmatpush1.bf16.msra.mxu0 %v490
    %1047 = vmatprep.subr.bf16.mxu0 0
    %1048 = vmatpush1.bf16.msra.mxu0 0
    %1049 = vmatprep.subr.bf16.mxu0 0
    %1050 = vmatpush1.bf16.msra.mxu0 0
    %1051 = vmatprep.subr.bf16.mxu0 0
    %1052 = vmatpush1.bf16.msra.mxu0 0
    %1053 = vmatprep.subr.bf16.mxu0 0
    %1054 = vmatpush1.bf16.msra.mxu0 0
    %1055 = vmatprep.subr.bf16.mxu0 0
    %1056 = vmatpush1.bf16.msra.mxu0 0
    %1057 = vmatprep.subr.bf16.mxu0 0
    %1058 = vmatpush1.bf16.msra.mxu0 0
    %1059 = vmatprep.subr.bf16.mxu0 0
    %1060 = vmatpush1.bf16.msra.mxu0 0
    %1061 = vmatprep.subr.bf16.mxu0 0
    %1062 = vmatpush1.bf16.msra.mxu0 0
    %1063 = vmatprep.mubr.bf16.mxu0 0
    %1064 = vmatmul.mubr.bf16.gmra.mrb[0].mxu0 %v1030
    %v1065 = vpop.f32.mrb[0].mxu0
    %v1066 = vadd.f32 %v255, %v1065
    %v1067 = vpop.f32.mrb[0].mxu0
    %v1068 = vadd.f32 %v257, %v1067
    %v1069 = vpop.f32.mrb[0].mxu0
    %v1070 = vpop.f32.mrb[0].mxu0
    %1071 = vdwg.mxu0
    %1072 = vmatprep.subr.bf16.mxu0 %v465
    %1073 = vmatpush1.bf16.msra.mxu0 %v464
    %1074 = vmatprep.subr.bf16.mxu0 %v469
    %1075 = vmatpush1.bf16.msra.mxu0 %v468
    %1076 = vmatprep.subr.bf16.mxu0 %v473
    %1077 = vmatpush1.bf16.msra.mxu0 %v472
    %1078 = vmatprep.subr.bf16.mxu0 %v477
    %1079 = vmatpush1.bf16.msra.mxu0 %v476
    %1080 = vmatprep.subr.bf16.mxu0 %v481
    %1081 = vmatpush1.bf16.msra.mxu0 %v480
    %1082 = vmatprep.subr.bf16.mxu0 %v485
    %1083 = vmatpush1.bf16.msra.mxu0 %v484
    %1084 = vmatprep.subr.bf16.mxu0 %v489
    %1085 = vmatpush1.bf16.msra.mxu0 %v488
    %1086 = vmatprep.subr.bf16.mxu0 %v493
    %1087 = vmatpush1.bf16.msra.mxu0 %v492
    %1088 = vmatprep.subr.bf16.mxu0 0
    %1089 = vmatpush1.bf16.msra.mxu0 0
    %1090 = vmatprep.subr.bf16.mxu0 0
    %1091 = vmatpush1.bf16.msra.mxu0 0
    %1092 = vmatprep.subr.bf16.mxu0 0
    %1093 = vmatpush1.bf16.msra.mxu0 0
    %1094 = vmatprep.subr.bf16.mxu0 0
    %1095 = vmatpush1.bf16.msra.mxu0 0
    %1096 = vmatprep.subr.bf16.mxu0 0
    %1097 = vmatpush1.bf16.msra.mxu0 0
    %1098 = vmatprep.subr.bf16.mxu0 0
    %1099 = vmatpush1.bf16.msra.mxu0 0
    %1100 = vmatprep.subr.bf16.mxu0 0
    %1101 = vmatpush1.bf16.msra.mxu0 0
    %1102 = vmatprep.subr.bf16.mxu0 0
    %1103 = vmatpush1.bf16.msra.mxu0 0
    %1104 = vmatprep.mubr.bf16.mxu0 0
    %1105 = vmatmul.mubr.bf16.gmra.mrb[0].mxu0 %v1030
    %v1106 = vpop.f32.mrb[0].mxu0
    %v1107 = vadd.f32 %v336, %v1106
    %v1108 = vpop.f32.mrb[0].mxu0
    %v1109 = vadd.f32 %v338, %v1108
    %v1110 = vpop.f32.mrb[0].mxu0
    %v1111 = vpop.f32.mrb[0].mxu0
    %1112 = vdwg.mxu0
    %v1113 = vtanh.pop %v1066
    %v1114 = vtanh.pop %v1068
    %v1115 = vtanh.pop %v1107
    %v1116 = vtanh.pop %v1109
    %v1117 = vmul.f32 %v1113, %v47
    %v1118 = vmul.f32 %v1114, %v48
    %v1119 = vmul.f32 %v1115, %v49
    %v1120 = vmul.f32 %v1116, %v50
    %v1121 = vadd.f32 %v1117, %v51
    %v1122 = vadd.f32 %v1118, %v52
    %v1123 = vadd.f32 %v1119, %v53
    %v1124 = vadd.f32 %v1120, %v54
    %v1125 = vmul.f32 %v1122, %v1026
    %v1126 = vmul.f32 %v1121, %v1124
    %v1127 = vadd.f32 %v1125, %v1126
    %v1128 = vtanh.pop %v1127
    %v1129 = vmul.f32 %v1123, %v1128
    %v1130 = vadd.f32 %v1029, %v1129
    %v1131 = vpack.c.bf16 %v1129, %v1129
    %1132 = vmatprep.subr.bf16.mxu0 %v463
    %1133 = vmatpush1.bf16.msra.mxu0 %v462
    %1134 = vmatprep.subr.bf16.mxu0 %v467
    %1135 = vmatpush1.bf16.msra.mxu0 %v466
    %1136 = vmatprep.subr.bf16.mxu0 %v471
    %1137 = vmatpush1.bf16.msra.mxu0 %v470
    %1138 = vmatprep.subr.bf16.mxu0 %v475
    %1139 = vmatpush1.bf16.msra.mxu0 %v474
    %1140 = vmatprep.subr.bf16.mxu0 %v479
    %1141 = vmatpush1.bf16.msra.mxu0 %v478
    %1142 = vmatprep.subr.bf16.mxu0 %v483
    %1143 = vmatpush1.bf16.msra.mxu0 %v482
    %1144 = vmatprep.subr.bf16.mxu0 %v487
    %1145 = vmatpush1.bf16.msra.mxu0 %v486
    %1146 = vmatprep.subr.bf16.mxu0 %v491
    %1147 = vmatpush1.bf16.msra.mxu0 %v490
    %1148 = vmatprep.subr.bf16.mxu0 0
    %1149 = vmatpush1.bf16.msra.mxu0 0
    %1150 = vmatprep.subr.bf16.mxu0 0
    %1151 = vmatpush1.bf16.msra.mxu0 0
    %1152 = vmatprep.subr.bf16.mxu0 0
    %1153 = vmatpush1.bf16.msra.mxu0 0
    %1154 = vmatprep.subr.bf16.mxu0 0
    %1155 = vmatpush1.bf16.msra.mxu0 0
    %1156 = vmatprep.subr.bf16.mxu0 0
    %1157 = vmatpush1.bf16.msra.mxu0 0
    %1158 = vmatprep.subr.bf16.mxu0 0
    %1159 = vmatpush1.bf16.msra.mxu0 0
    %1160 = vmatprep.subr.bf16.mxu0 0
    %1161 = vmatpush1.bf16.msra.mxu0 0
    %1162 = vmatprep.subr.bf16.mxu0 0
    %1163 = vmatpush1.bf16.msra.mxu0 0
    %1164 = vmatprep.mubr.bf16.mxu0 0
    %1165 = vmatmul.mubr.bf16.gmra.mrb[0].mxu0 %v1131
    %v1166 = vpop.f32.mrb[0].mxu0
    %v1167 = vadd.f32 %v259, %v1166
    %v1168 = vpop.f32.mrb[0].mxu0
    %v1169 = vadd.f32 %v261, %v1168
    %v1170 = vpop.f32.mrb[0].mxu0
    %v1171 = vpop.f32.mrb[0].mxu0
    %1172 = vdwg.mxu0
    %1173 = vmatprep.subr.bf16.mxu0 %v465
    %1174 = vmatpush1.bf16.msra.mxu0 %v464
    %1175 = vmatprep.subr.bf16.mxu0 %v469
    %1176 = vmatpush1.bf16.msra.mxu0 %v468
    %1177 = vmatprep.subr.bf16.mxu0 %v473
    %1178 = vmatpush1.bf16.msra.mxu0 %v472
    %1179 = vmatprep.subr.bf16.mxu0 %v477
    %1180 = vmatpush1.bf16.msra.mxu0 %v476
    %1181 = vmatprep.subr.bf16.mxu0 %v481
    %1182 = vmatpush1.bf16.msra.mxu0 %v480
    %1183 = vmatprep.subr.bf16.mxu0 %v485
    %1184 = vmatpush1.bf16.msra.mxu0 %v484
    %1185 = vmatprep.subr.bf16.mxu0 %v489
    %1186 = vmatpush1.bf16.msra.mxu0 %v488
    %1187 = vmatprep.subr.bf16.mxu0 %v493
    %1188 = vmatpush1.bf16.msra.mxu0 %v492
    %1189 = vmatprep.subr.bf16.mxu0 0
    %1190 = vmatpush1.bf16.msra.mxu0 0
    %1191 = vmatprep.subr.bf16.mxu0 0
    %1192 = vmatpush1.bf16.msra.mxu0 0
    %1193 = vmatprep.subr.bf16.mxu0 0
    %1194 = vmatpush1.bf16.msra.mxu0 0
    %1195 = vmatprep.subr.bf16.mxu0 0
    %1196 = vmatpush1.bf16.msra.mxu0 0
    %1197 = vmatprep.subr.bf16.mxu0 0
    %1198 = vmatpush1.bf16.msra.mxu0 0
    %1199 = vmatprep.subr.bf16.mxu0 0
    %1200 = vmatpush1.bf16.msra.mxu0 0
    %1201 = vmatprep.subr.bf16.mxu0 0
    %1202 = vmatpush1.bf16.msra.mxu0 0
    %1203 = vmatprep.subr.bf16.mxu0 0
    %1204 = vmatpush1.bf16.msra.mxu0 0
    %1205 = vmatprep.mubr.bf16.mxu0 0
    %1206 = vmatmul.mubr.bf16.gmra.mrb[0].mxu0 %v1131
    %v1207 = vpop.f32.mrb[0].mxu0
    %v1208 = vadd.f32 %v340, %v1207
    %v1209 = vpop.f32.mrb[0].mxu0
    %v1210 = vadd.f32 %v342, %v1209
    %v1211 = vpop.f32.mrb[0].mxu0
    %v1212 = vpop.f32.mrb[0].mxu0
    %1213 = vdwg.mxu0
    %v1214 = vtanh.pop %v1167
    %v1215 = vtanh.pop %v1169
    %v1216 = vtanh.pop %v1208
    %v1217 = vtanh.pop %v1210
    %v1218 = vmul.f32 %v1214, %v47
    %v1219 = vmul.f32 %v1215, %v48
    %v1220 = vmul.f32 %v1216, %v49
    %v1221 = vmul.f32 %v1217, %v50
    %v1222 = vadd.f32 %v1218, %v51
    %v1223 = vadd.f32 %v1219, %v52
    %v1224 = vadd.f32 %v1220, %v53
    %v1225 = vadd.f32 %v1221, %v54
    %v1226 = vmul.f32 %v1223, %v1127
    %v1227 = vmul.f32 %v1222, %v1225
    %v1228 = vadd.f32 %v1226, %v1227
    %v1229 = vtanh.pop %v1228
    %v1230 = vmul.f32 %v1224, %v1229
    %v1231 = vadd.f32 %v1130, %v1230
    %v1232 = vpack.c.bf16 %v1230, %v1230
    %1233 = vmatprep.subr.bf16.mxu0 %v463
    %1234 = vmatpush1.bf16.msra.mxu0 %v462
    %1235 = vmatprep.subr.bf16.mxu0 %v467
    %1236 = vmatpush1.bf16.msra.mxu0 %v466
    %1237 = vmatprep.subr.bf16.mxu0 %v471
    %1238 = vmatpush1.bf16.msra.mxu0 %v470
    %1239 = vmatprep.subr.bf16.mxu0 %v475
    %1240 = vmatpush1.bf16.msra.mxu0 %v474
    %1241 = vmatprep.subr.bf16.mxu0 %v479
    %1242 = vmatpush1.bf16.msra.mxu0 %v478
    %1243 = vmatprep.subr.bf16.mxu0 %v483
    %1244 = vmatpush1.bf16.msra.mxu0 %v482
    %1245 = vmatprep.subr.bf16.mxu0 %v487
    %1246 = vmatpush1.bf16.msra.mxu0 %v486
    %1247 = vmatprep.subr.bf16.mxu0 %v491
    %1248 = vmatpush1.bf16.msra.mxu0 %v490
    %1249 = vmatprep.subr.bf16.mxu0 0
    %1250 = vmatpush1.bf16.msra.mxu0 0
    %1251 = vmatprep.subr.bf16.mxu0 0
    %1252 = vmatpush1.bf16.msra.mxu0 0
    %1253 = vmatprep.subr.bf16.mxu0 0
    %1254 = vmatpush1.bf16.msra.mxu0 0
    %1255 = vmatprep.subr.bf16.mxu0 0
    %1256 = vmatpush1.bf16.msra.mxu0 0
    %1257 = vmatprep.subr.bf16.mxu0 0
    %1258 = vmatpush1.bf16.msra.mxu0 0
    %1259 = vmatprep.subr.bf16.mxu0 0
    %1260 = vmatpush1.bf16.msra.mxu0 0
    %1261 = vmatprep.subr.bf16.mxu0 0
    %1262 = vmatpush1.bf16.msra.mxu0 0
    %1263 = vmatprep.subr.bf16.mxu0 0
    %1264 = vmatpush1.bf16.msra.mxu0 0
    %1265 = vmatprep.mubr.bf16.mxu0 0
    %1266 = vmatmul.mubr.bf16.gmra.mrb[0].mxu0 %v1232
    %v1267 = vpop.f32.mrb[0].mxu0
    %v1268 = vadd.f32 %v265, %v1267
    %v1269 = vpop.f32.mrb[0].mxu0
    %v1270 = vadd.f32 %v267, %v1269
    %v1271 = vpop.f32.mrb[0].mxu0
    %v1272 = vpop.f32.mrb[0].mxu0
    %1273 = vdwg.mxu0
    %1274 = vmatprep.subr.bf16.mxu0 %v465
    %1275 = vmatpush1.bf16.msra.mxu0 %v464
    %1276 = vmatprep.subr.bf16.mxu0 %v469
    %1277 = vmatpush1.bf16.msra.mxu0 %v468
    %1278 = vmatprep.subr.bf16.mxu0 %v473
    %1279 = vmatpush1.bf16.msra.mxu0 %v472
    %1280 = vmatprep.subr.bf16.mxu0 %v477
    %1281 = vmatpush1.bf16.msra.mxu0 %v476
    %1282 = vmatprep.subr.bf16.mxu0 %v481
    %1283 = vmatpush1.bf16.msra.mxu0 %v480
    %1284 = vmatprep.subr.bf16.mxu0 %v485
    %1285 = vmatpush1.bf16.msra.mxu0 %v484
    %1286 = vmatprep.subr.bf16.mxu0 %v489
    %1287 = vmatpush1.bf16.msra.mxu0 %v488
    %1288 = vmatprep.subr.bf16.mxu0 %v493
    %1289 = vmatpush1.bf16.msra.mxu0 %v492
    %1290 = vmatprep.subr.bf16.mxu0 0
    %1291 = vmatpush1.bf16.msra.mxu0 0
    %1292 = vmatprep.subr.bf16.mxu0 0
    %1293 = vmatpush1.bf16.msra.mxu0 0
    %1294 = vmatprep.subr.bf16.mxu0 0
    %1295 = vmatpush1.bf16.msra.mxu0 0
    %1296 = vmatprep.subr.bf16.mxu0 0
    %1297 = vmatpush1.bf16.msra.mxu0 0
    %1298 = vmatprep.subr.bf16.mxu0 0
    %1299 = vmatpush1.bf16.msra.mxu0 0
    %1300 = vmatprep.subr.bf16.mxu0 0
    %1301 = vmatpush1.bf16.msra.mxu0 0
    %1302 = vmatprep.subr.bf16.mxu0 0
    %1303 = vmatpush1.bf16.msra.mxu0 0
    %1304 = vmatprep.subr.bf16.mxu0 0
    %1305 = vmatpush1.bf16.msra.mxu0 0
    %1306 = vmatprep.mubr.bf16.mxu0 0
    %1307 = vmatmul.mubr.bf16.gmra.mrb[0].mxu0 %v1232
    %v1308 = vpop.f32.mrb[0].mxu0
    %v1309 = vadd.f32 %v346, %v1308
    %v1310 = vpop.f32.mrb[0].mxu0
    %v1311 = vadd.f32 %v348, %v1310
    %v1312 = vpop.f32.mrb[0].mxu0
    %v1313 = vpop.f32.mrb[0].mxu0
    %1314 = vdwg.mxu0
    %v1315 = vtanh.pop %v1268
    %v1316 = vtanh.pop %v1270
    %v1317 = vtanh.pop %v1309
    %v1318 = vtanh.pop %v1311
    %v1319 = vmul.f32 %v1315, %v47
    %v1320 = vmul.f32 %v1316, %v48
    %v1321 = vmul.f32 %v1317, %v49
    %v1322 = vmul.f32 %v1318, %v50
    %v1323 = vadd.f32 %v1319, %v51
    %v1324 = vadd.f32 %v1320, %v52
    %v1325 = vadd.f32 %v1321, %v53
    %v1326 = vadd.f32 %v1322, %v54
    %v1327 = vmul.f32 %v1324, %v1228
    %v1328 = vmul.f32 %v1323, %v1326
    %v1329 = vadd.f32 %v1327, %v1328
    %v1330 = vtanh.pop %v1329
    %v1331 = vmul.f32 %v1325, %v1330
    %v1332 = vadd.f32 %v1231, %v1331
    %v1333 = vmul.f32 %v1332, 0.125
    %v1334 = vpack.c.bf16 %v1333, %v1333
    %v1335 = vld [vmem:[%s5] sm:$0x1]
    %v1337 = vlaneseq
    %v1338 = vshrl.u32 %v1337, 7
    %v1339 = vsub.s32 0, %v1338
    %v1340 = vrot.slane %v1335, %v1339
    %1343 = vrot.lane.b32.xlu0 %v1334, 64
    %v1344 = vpop.permute.xlu0 %1343
    %v1353 = vunpack.c.l.b16 %v89
    %v1354 = vunpack.c.l.b16 %v90
    %v1355 = vunpack.c.l.b16 %v91
    %v1356 = vunpack.c.l.b16 %v92
    %v1357 = vunpack.c.l.b16 %v93
    %v1358 = vunpack.c.l.b16 %v94
    %v1359 = vunpack.c.l.b16 %v95
    %v1360 = vunpack.c.l.b16 %v96
    %v1361 = vpack.c.b16 %v1354, %v1353
    %v1362 = vpack.c.b16 %v1356, %v1355
    %v1363 = vpack.c.b16 %v1358, %v1357
    %v1364 = vpack.c.b16 %v1360, %v1359
    %vm1369 = vcmask 523264
    %v1371 = vsel %vm1369, %v1344, 0
    %1373 = vmatprep.subr.bf16.mxu0 0
    %1374 = vmatpush1.bf16.msra.mxu0 %v1361
    %1375 = vmatprep.subr.bf16.mxu0 0
    %1376 = vmatpush1.bf16.msra.mxu0 %v1362
    %1377 = vmatprep.subr.bf16.mxu0 0
    %1378 = vmatpush1.bf16.msra.mxu0 %v1363
    %1379 = vmatprep.subr.bf16.mxu0 0
    %1380 = vmatpush1.bf16.msra.mxu0 %v1364
    %1381 = vmatprep.subr.bf16.mxu0 0
    %1382 = vmatpush1.bf16.msra.mxu0 0
    %1383 = vmatprep.subr.bf16.mxu0 0
    %1384 = vmatpush1.bf16.msra.mxu0 0
    %1385 = vmatprep.subr.bf16.mxu0 0
    %1386 = vmatpush1.bf16.msra.mxu0 0
    %1387 = vmatprep.subr.bf16.mxu0 0
    %1388 = vmatpush1.bf16.msra.mxu0 0
    %1389 = vmatprep.subr.bf16.mxu0 0
    %1390 = vmatpush1.bf16.msra.mxu0 0
    %1391 = vmatprep.subr.bf16.mxu0 0
    %1392 = vmatpush1.bf16.msra.mxu0 0
    %1393 = vmatprep.subr.bf16.mxu0 0
    %1394 = vmatpush1.bf16.msra.mxu0 0
    %1395 = vmatprep.subr.bf16.mxu0 0
    %1396 = vmatpush1.bf16.msra.mxu0 0
    %1397 = vmatprep.subr.bf16.mxu0 0
    %1398 = vmatpush1.bf16.msra.mxu0 0
    %1399 = vmatprep.subr.bf16.mxu0 0
    %1400 = vmatpush1.bf16.msra.mxu0 0
    %1401 = vmatprep.subr.bf16.mxu0 0
    %1402 = vmatpush1.bf16.msra.mxu0 0
    %1403 = vmatprep.subr.bf16.mxu0 0
    %1404 = vmatpush1.bf16.msra.mxu0 0
    %1405 = vmatprep.mubr.bf16.mxu0 0
    %1406 = vmatmul.mubr.bf16.gmra.mrb[0].mxu0 %v1371
    %v1407 = vpop.f32.mrb[0].mxu0
    %v1408 = vadd.f32 %v1340, %v1407
    %v1409 = vpop.f32.mrb[0].mxu0
    %v1410 = vpop.f32.mrb[0].mxu0
    %v1411 = vpop.f32.mrb[0].mxu0
    %1412 = vdwg.mxu0
    %v1413 = vsel %vm1369, %v1408, -inf
    %1414 = vmax.xlane.f32.xlu0 %v1413
    %v1415 = vpop.xlane.xlu0 %1414
    %v1416 = vsub.f32 %v1408, %v1415
    %v1417 = vmul.f32 %v1416, 1.442695
    %v1418 = vpow.pop %v1417
    %v1419 = vsel %vm1369, %v1418, 0.0
    %1420 = vadd.xlane.f32.xlu0 %v1419
    %v1421 = vpop.xlane.xlu0 %1420
    %v1422 = vrcp.pop %v1421
    %v1423 = vmul.f32 %v1418, %v1422
    %1424 = vst.msk [vmem:[%s6] sm:$0xff] %vm1369, %v1423
    // Predicated region
    $region30: #{seq_compare_forward.1} parent=1 // pred_check
      _
    $region31: #{seq_compare_forward.1} parent=1 // pred_check_branch
      %1426 = sbr.rel (0) target = $region33
    $region32: #{seq_compare_forward.1} parent=1 // pred_region
      _
    $region33: #{seq_compare_forward.1} parent=1 // pred_fallthru
      _
    // Predicated region
    $region34: #{seq_compare_forward.1} parent=1 // pred_check
      _
    $region35: #{seq_compare_forward.1} parent=1 // pred_check_branch
      %1428 = sbr.rel (0) target = $region37
    $region36: #{seq_compare_forward.1} parent=1 // pred_region
      _
    $region37: #{seq_compare_forward.1} parent=1 // pred_fallthru
      _
    %1429 = vsyncpa [#allocation3], 1

</llo_original>
